<compile_context>
chip_gen: v6e
topology: v6e:2x2x1
jax: 0.10.0
libtpu: 0.0.40
codegen_flags: <defaults>
</compile_context>

<pallas_src>
import functools

import jax
import jax.numpy as jnp
from jax.experimental import pallas as pl
from jax.experimental.pallas import tpu as pltpu

FLOAT_MIN = float(jnp.finfo(jnp.float32).min)  # RLlib FLOAT_MIN (-3.4028235e38)


# ----------------------------------------------------------------------------
# Fused forward kernel: FC trunk + LSTM recurrence + action head + mask.
# ----------------------------------------------------------------------------
def _fused_forward_kernel(
    obs_ref, mask_ref,
    w0_ref, b0_ref, w1_ref, b1_ref,
    wih_ref, whh_ref, bl_ref,
    wa_ref, ba_ref,
    h0_ref, c0_ref,
    out_ref, hn_ref, cn_ref,
    y_scr,
    *, B, T, H):
    # ---- FC trunk (row-independent, batch-major rows b*T + t) -------------
    x = jnp.tanh(
        jnp.dot(obs_ref[...], w0_ref[...], preferred_element_type=jnp.float32)
        + b0_ref[...])
    x = jnp.tanh(
        jnp.dot(x, w1_ref[...], preferred_element_type=jnp.float32)
        + b1_ref[...])

    # ---- Hoisted LSTM input projection (one MXU push for all B*T rows) ----
    gates_x = (
        jnp.dot(x, wih_ref[...], preferred_element_type=jnp.float32)
        + bl_ref[...])                                   # (B*T, 4H)

    whh = whh_ref[...]                                   # (H, 4H), resident
    h0 = h0_ref[...]
    c0 = c0_ref[...]

    # Lane mask for the g-gate (PyTorch gate order i, f, g, o): lanes [2H, 3H)
    lane = jax.lax.broadcasted_iota(jnp.int32, (1, 4 * H), 1)
    is_g = (lane >= 2 * H) & (lane < 3 * H)

    # ---- Recurrence: per-batch contiguous row blocks, fully unrolled ------
    for b in range(B):
        h = h0[b:b + 1, :]                               # (1, H)
        c = c0[b:b + 1, :]                               # (1, H)
        gx_b = gates_x[b * T:(b + 1) * T, :]             # (T, 4H) contiguous
        for t in range(T):
            gates = gx_b[t:t + 1, :] + jnp.dot(
                h, whh, preferred_element_type=jnp.float32)      # (1, 4H)
            # One full-vreg sigmoid + one full-vreg tanh, lane-selected.
            act = jnp.where(is_g, jnp.tanh(gates), jax.nn.sigmoid(gates))
            i_g = act[:, 0 * H:1 * H]
            f_g = act[:, 1 * H:2 * H]
            g_g = act[:, 2 * H:3 * H]
            o_g = act[:, 3 * H:4 * H]
            c = f_g * c + i_g * g_g
            h = o_g * jnp.tanh(c)
            # batch-major row index = b*T + t  -> no post-transpose needed
            y_scr[pl.ds(b * T + t, 1), :] = h
        hn_ref[pl.ds(b, 1), :] = h
        cn_ref[pl.ds(b, 1), :] = c

    # ---- Action head + action-mask (single matmul over all B*T rows) ------
    feat2 = jnp.tanh(y_scr[...])                         # (B*T, H)
    logits = (
        jnp.dot(feat2, wa_ref[...], preferred_element_type=jnp.float32)
        + ba_ref[...])                                   # (B*T, A)
    inf_mask = jnp.maximum(jnp.log(mask_ref[...]), FLOAT_MIN)
    out_ref[...] = logits + inf_mask


# ----------------------------------------------------------------------------
# Wrapper: one pallas_call, everything VMEM-resident.
# ----------------------------------------------------------------------------
@jax.jit
def rlib_lstm_forward(params, obs, action_mask, h0, c0):
    B, H = h0.shape
    BT = obs.shape[0]
    T = BT // B
    A = params["wa"].shape[1]

    kernel = functools.partial(_fused_forward_kernel, B=B, T=T, H=H)

    out, h_n, c_n = pl.pallas_call(
        kernel,
        out_shape=(
            jax.ShapeDtypeStruct((BT, A), jnp.float32),   # masked logits
            jax.ShapeDtypeStruct((B, H), jnp.float32),    # h_n
            jax.ShapeDtypeStruct((B, H), jnp.float32),    # c_n
        ),
        scratch_shapes=[pltpu.VMEM((BT, H), jnp.float32)],  # y (batch-major)
        compiler_params=pltpu.CompilerParams(
            vmem_limit_bytes=16 * 1024 * 1024),
    )(
        obs, action_mask,
        params["w0"], params["b0"].reshape(1, -1),
        params["w1"], params["b1"].reshape(1, -1),
        params["w_ih_t"], params["w_hh_t"], params["b_lstm"].reshape(1, -1),
        params["wa"], params["ba"].reshape(1, -1),
        h0, c0,
    )
    return out, (h_n, c_n)


# ----------------------------------------------------------------------------
# Pure-JAX reference (for self-check)
# ----------------------------------------------------------------------------
def reference_forward(params, obs, action_mask, h0, c0, B, T):
    x = jnp.tanh(obs @ params["w0"] + params["b0"])
    x = jnp.tanh(x @ params["w1"] + params["b1"])
    x = x.reshape(B, T, -1)
    H = h0.shape[-1]

    def step(carry, x_t):
        h, c = carry
        gates = x_t @ params["w_ih_t"] + h @ params["w_hh_t"] + params["b_lstm"]
        i = jax.nn.sigmoid(gates[:, 0 * H:1 * H])
        f = jax.nn.sigmoid(gates[:, 1 * H:2 * H])
        g = jnp.tanh(gates[:, 2 * H:3 * H])
        o = jax.nn.sigmoid(gates[:, 3 * H:4 * H])
        c = f * c + i * g
        h = o * jnp.tanh(c)
        return (h, c), h

    (h_n, c_n), ys = jax.lax.scan(step, (h0, c0), jnp.transpose(x, (1, 0, 2)))
    y_flat = jnp.transpose(ys, (1, 0, 2)).reshape(B * T, H)
    feats = jnp.tanh(y_flat)
    logits = feats @ params["wa"] + params["ba"]
    inf_mask = jnp.maximum(jnp.log(action_mask), FLOAT_MIN)
    return logits + inf_mask, (h_n, c_n)


# ----------------------------------------------------------------------------
# Main
# ----------------------------------------------------------------------------
if __name__ == "__main__":
    B, T = 2, 8
    OBS_SIZE = 16
    FC_SIZE = 32
    LSTM_H = 32
    NUM_OUTPUTS = 8

    key = jax.random.PRNGKey(0)
    keys = jax.random.split(key, 12)

    def uni(k, shape, bound):
        return jax.random.uniform(k, shape, jnp.float32, -bound, bound)

    k_fc = 1.0 / jnp.sqrt(FC_SIZE)
    k_obs = 1.0 / jnp.sqrt(OBS_SIZE)
    k_h = 1.0 / jnp.sqrt(LSTM_H)

    params = {
        # FCN trunk (stored transposed: (in, out))
        "w0": uni(keys[0], (OBS_SIZE, FC_SIZE), k_obs),
        "b0": uni(keys[1], (FC_SIZE,), k_obs),
        "w1": uni(keys[2], (FC_SIZE, FC_SIZE), k_fc),
        "b1": uni(keys[3], (FC_SIZE,), k_fc),
        # LSTM (PyTorch weight_ih_l0: (4H, F) -> transposed (F, 4H))
        "w_ih_t": uni(keys[4], (FC_SIZE, 4 * LSTM_H), k_h),
        "w_hh_t": uni(keys[5], (LSTM_H, 4 * LSTM_H), k_h),
        "b_lstm": uni(keys[6], (4 * LSTM_H,), k_h) + uni(keys[7], (4 * LSTM_H,), k_h),
        # action layer (H, A)
        "wa": uni(keys[8], (LSTM_H, NUM_OUTPUTS), k_h),
        "ba": uni(keys[9], (NUM_OUTPUTS,), k_h),
    }

    obs = jax.random.normal(keys[10], (B * T, OBS_SIZE), jnp.float32)
    action_mask = (
        jax.random.uniform(keys[11], (B * T, NUM_OUTPUTS)) > 0.3
    ).astype(jnp.float32)
    # get_initial_state() -> zeros
    h0 = jnp.zeros((B, LSTM_H), jnp.float32)
    c0 = jnp.zeros((B, LSTM_H), jnp.float32)

    out, (h_n, c_n) = rlib_lstm_forward(params, obs, action_mask, h0, c0)
    jax.block_until_ready((out, h_n, c_n))

    ref_out, (ref_h, ref_c) = reference_forward(params, obs, action_mask, h0, c0, B, T)
    assert out.shape == (B * T, NUM_OUTPUTS)
    assert h_n.shape == (B, LSTM_H) and c_n.shape == (B, LSTM_H)
    assert jnp.allclose(out, ref_out, rtol=1e-3, atol=1e-3)
    assert jnp.allclose(h_n, ref_h, rtol=1e-3, atol=1e-3)
    assert jnp.allclose(c_n, ref_c, rtol=1e-3, atol=1e-3)

    print("KERNEL_OK")
</pallas_src>

<mosaic_0001>
module attributes {stable_mosaic.version = 11 : i64} {
  func.func @_fused_forward_kernel(%arg0: memref<16x16xf32, #tpu.memory_space<vmem>>, %arg1: memref<16x8xf32, #tpu.memory_space<vmem>>, %arg2: memref<16x32xf32, #tpu.memory_space<vmem>>, %arg3: memref<1x32xf32, #tpu.memory_space<vmem>>, %arg4: memref<32x32xf32, #tpu.memory_space<vmem>>, %arg5: memref<1x32xf32, #tpu.memory_space<vmem>>, %arg6: memref<32x128xf32, #tpu.memory_space<vmem>>, %arg7: memref<32x128xf32, #tpu.memory_space<vmem>>, %arg8: memref<1x128xf32, #tpu.memory_space<vmem>>, %arg9: memref<32x8xf32, #tpu.memory_space<vmem>>, %arg10: memref<1x8xf32, #tpu.memory_space<vmem>>, %arg11: memref<2x32xf32, #tpu.memory_space<vmem>>, %arg12: memref<2x32xf32, #tpu.memory_space<vmem>>, %arg13: memref<16x8xf32, #tpu.memory_space<vmem>>, %arg14: memref<2x32xf32, #tpu.memory_space<vmem>>, %arg15: memref<2x32xf32, #tpu.memory_space<vmem>>, %arg16: memref<16x32xf32, #tpu.memory_space<vmem>>) attributes {dimension_semantics = [], scalar_prefetch = 0 : i64, scratch_operands = 1 : i64, tpu.core_type = #tpu.core_type<tc>} {
    %c0 = arith.constant 0 : index
    %c0_0 = arith.constant 0 : index
    %0 = vector.load %arg0[%c0, %c0_0] : memref<16x16xf32, #tpu.memory_space<vmem>>, vector<16x16xf32>
    %c0_1 = arith.constant 0 : index
    %c0_2 = arith.constant 0 : index
    %1 = vector.load %arg2[%c0_1, %c0_2] : memref<16x32xf32, #tpu.memory_space<vmem>>, vector<16x32xf32>
    %cst = arith.constant dense<0.000000e+00> : vector<16x32xf32>
    %2 = tpu.matmul %0, %1, %cst {dimension_numbers = #tpu.dot_dimension_numbers<[1], [0], [0], [1], [0, 0, 1, 1], [], []>} : vector<16x16xf32>, vector<16x32xf32>, vector<16x32xf32> -> vector<16x32xf32>
    %c0_3 = arith.constant 0 : index
    %c0_4 = arith.constant 0 : index
    %3 = vector.load %arg3[%c0_3, %c0_4] : memref<1x32xf32, #tpu.memory_space<vmem>>, vector<1x32xf32>
    %4 = vector.broadcast %3 : vector<1x32xf32> to vector<16x32xf32>
    %5 = arith.addf %2, %4 : vector<16x32xf32>
    %6 = math.tanh %5 : vector<16x32xf32>
    %c0_5 = arith.constant 0 : index
    %c0_6 = arith.constant 0 : index
    %7 = vector.load %arg4[%c0_5, %c0_6] : memref<32x32xf32, #tpu.memory_space<vmem>>, vector<32x32xf32>
    %cst_7 = arith.constant dense<0.000000e+00> : vector<16x32xf32>
    %8 = tpu.matmul %6, %7, %cst_7 {dimension_numbers = #tpu.dot_dimension_numbers<[1], [0], [0], [1], [0, 0, 1, 1], [], []>} : vector<16x32xf32>, vector<32x32xf32>, vector<16x32xf32> -> vector<16x32xf32>
    %c0_8 = arith.constant 0 : index
    %c0_9 = arith.constant 0 : index
    %9 = vector.load %arg5[%c0_8, %c0_9] : memref<1x32xf32, #tpu.memory_space<vmem>>, vector<1x32xf32>
    %10 = vector.broadcast %9 : vector<1x32xf32> to vector<16x32xf32>
    %11 = arith.addf %8, %10 : vector<16x32xf32>
    %12 = math.tanh %11 : vector<16x32xf32>
    %c0_10 = arith.constant 0 : index
    %c0_11 = arith.constant 0 : index
    %13 = vector.load %arg6[%c0_10, %c0_11] : memref<32x128xf32, #tpu.memory_space<vmem>>, vector<32x128xf32>
    %cst_12 = arith.constant dense<0.000000e+00> : vector<16x128xf32>
    %14 = tpu.matmul %12, %13, %cst_12 {dimension_numbers = #tpu.dot_dimension_numbers<[1], [0], [0], [1], [0, 0, 1, 1], [], []>} : vector<16x32xf32>, vector<32x128xf32>, vector<16x128xf32> -> vector<16x128xf32>
    %c0_13 = arith.constant 0 : index
    %c0_14 = arith.constant 0 : index
    %15 = vector.load %arg8[%c0_13, %c0_14] : memref<1x128xf32, #tpu.memory_space<vmem>>, vector<1x128xf32>
    %16 = vector.broadcast %15 : vector<1x128xf32> to vector<16x128xf32>
    %17 = arith.addf %14, %16 : vector<16x128xf32>
    %c0_15 = arith.constant 0 : index
    %c0_16 = arith.constant 0 : index
    %18 = vector.load %arg7[%c0_15, %c0_16] : memref<32x128xf32, #tpu.memory_space<vmem>>, vector<32x128xf32>
    %c0_17 = arith.constant 0 : index
    %c0_18 = arith.constant 0 : index
    %19 = vector.load %arg11[%c0_17, %c0_18] : memref<2x32xf32, #tpu.memory_space<vmem>>, vector<2x32xf32>
    %c0_19 = arith.constant 0 : index
    %c0_20 = arith.constant 0 : index
    %20 = vector.load %arg12[%c0_19, %c0_20] : memref<2x32xf32, #tpu.memory_space<vmem>>, vector<2x32xf32>
    %21 = tpu.iota {dimensions = array<i32: 1>} : vector<1x128xi32>
    %c64_i32 = arith.constant 64 : i32
    %22 = vector.broadcast %c64_i32 : i32 to vector<1x128xi32>
    %23 = arith.cmpi sge, %21, %22 : vector<1x128xi32>
    %c96_i32 = arith.constant 96 : i32
    %24 = vector.broadcast %c96_i32 : i32 to vector<1x128xi32>
    %25 = arith.cmpi slt, %21, %24 : vector<1x128xi32>
    %26 = arith.andi %23, %25 : vector<1x128xi1>
    %27 = vector.extract_strided_slice %19 {offsets = [0, 0], sizes = [1, 32], strides = [1, 1]} : vector<2x32xf32> to vector<1x32xf32>
    %28 = vector.extract_strided_slice %20 {offsets = [0, 0], sizes = [1, 32], strides = [1, 1]} : vector<2x32xf32> to vector<1x32xf32>
    %29 = vector.extract_strided_slice %17 {offsets = [0, 0], sizes = [8, 128], strides = [1, 1]} : vector<16x128xf32> to vector<8x128xf32>
    %30 = vector.extract_strided_slice %29 {offsets = [0, 0], sizes = [1, 128], strides = [1, 1]} : vector<8x128xf32> to vector<1x128xf32>
    %cst_21 = arith.constant dense<0.000000e+00> : vector<1x128xf32>
    %31 = tpu.matmul %27, %18, %cst_21 {dimension_numbers = #tpu.dot_dimension_numbers<[1], [0], [0], [1], [0, 0, 1, 1], [], []>} : vector<1x32xf32>, vector<32x128xf32>, vector<1x128xf32> -> vector<1x128xf32>
    %32 = arith.addf %30, %31 : vector<1x128xf32>
    %33 = math.tanh %32 : vector<1x128xf32>
    %34 = arith.negf %32 : vector<1x128xf32>
    %35 = math.exp %34 : vector<1x128xf32>
    %cst_22 = arith.constant 1.000000e+00 : f32
    %36 = vector.broadcast %cst_22 : f32 to vector<1x128xf32>
    %37 = arith.addf %36, %35 : vector<1x128xf32>
    %38 = arith.divf %36, %37 : vector<1x128xf32>
    %39 = arith.select %26, %33, %38 : vector<1x128xi1>, vector<1x128xf32>
    %40 = vector.extract_strided_slice %39 {offsets = [0, 0], sizes = [1, 32], strides = [1, 1]} : vector<1x128xf32> to vector<1x32xf32>
    %41 = vector.extract_strided_slice %39 {offsets = [0, 32], sizes = [1, 32], strides = [1, 1]} : vector<1x128xf32> to vector<1x32xf32>
    %42 = vector.extract_strided_slice %39 {offsets = [0, 64], sizes = [1, 32], strides = [1, 1]} : vector<1x128xf32> to vector<1x32xf32>
    %43 = vector.extract_strided_slice %39 {offsets = [0, 96], sizes = [1, 32], strides = [1, 1]} : vector<1x128xf32> to vector<1x32xf32>
    %44 = arith.mulf %41, %28 : vector<1x32xf32>
    %45 = arith.mulf %40, %42 : vector<1x32xf32>
    %46 = arith.addf %44, %45 : vector<1x32xf32>
    %47 = math.tanh %46 : vector<1x32xf32>
    %48 = arith.mulf %43, %47 : vector<1x32xf32>
    %c0_23 = arith.constant 0 : index
    %c0_24 = arith.constant 0 : index
    %49 = vector.load %arg16[%c0_23, %c0_24] : memref<16x32xf32, #tpu.memory_space<vmem>>, vector<1x32xf32>
    tpu.vector_store %arg16[%c0_23, %c0_24], %48 {strides = array<i32>} : memref<16x32xf32, #tpu.memory_space<vmem>>, vector<1x32xf32>,
    %50 = vector.extract_strided_slice %29 {offsets = [1, 0], sizes = [1, 128], strides = [1, 1]} : vector<8x128xf32> to vector<1x128xf32>
    %cst_25 = arith.constant dense<0.000000e+00> : vector<1x128xf32>
    %51 = tpu.matmul %48, %18, %cst_25 {dimension_numbers = #tpu.dot_dimension_numbers<[1], [0], [0], [1], [0, 0, 1, 1], [], []>} : vector<1x32xf32>, vector<32x128xf32>, vector<1x128xf32> -> vector<1x128xf32>
    %52 = arith.addf %50, %51 : vector<1x128xf32>
    %53 = math.tanh %52 : vector<1x128xf32>
    %54 = arith.negf %52 : vector<1x128xf32>
    %55 = math.exp %54 : vector<1x128xf32>
    %cst_26 = arith.constant 1.000000e+00 : f32
    %56 = vector.broadcast %cst_26 : f32 to vector<1x128xf32>
    %57 = arith.addf %56, %55 : vector<1x128xf32>
    %58 = arith.divf %56, %57 : vector<1x128xf32>
    %59 = arith.select %26, %53, %58 : vector<1x128xi1>, vector<1x128xf32>
    %60 = vector.extract_strided_slice %59 {offsets = [0, 0], sizes = [1, 32], strides = [1, 1]} : vector<1x128xf32> to vector<1x32xf32>
    %61 = vector.extract_strided_slice %59 {offsets = [0, 32], sizes = [1, 32], strides = [1, 1]} : vector<1x128xf32> to vector<1x32xf32>
    %62 = vector.extract_strided_slice %59 {offsets = [0, 64], sizes = [1, 32], strides = [1, 1]} : vector<1x128xf32> to vector<1x32xf32>
    %63 = vector.extract_strided_slice %59 {offsets = [0, 96], sizes = [1, 32], strides = [1, 1]} : vector<1x128xf32> to vector<1x32xf32>
    %64 = arith.mulf %61, %46 : vector<1x32xf32>
    %65 = arith.mulf %60, %62 : vector<1x32xf32>
    %66 = arith.addf %64, %65 : vector<1x32xf32>
    %67 = math.tanh %66 : vector<1x32xf32>
    %68 = arith.mulf %63, %67 : vector<1x32xf32>
    %c1 = arith.constant 1 : index
    %c0_27 = arith.constant 0 : index
    %69 = vector.load %arg16[%c1, %c0_27] : memref<16x32xf32, #tpu.memory_space<vmem>>, vector<1x32xf32>
    tpu.vector_store %arg16[%c1, %c0_27], %68 {strides = array<i32>} : memref<16x32xf32, #tpu.memory_space<vmem>>, vector<1x32xf32>,
    %70 = vector.extract_strided_slice %29 {offsets = [2, 0], sizes = [1, 128], strides = [1, 1]} : vector<8x128xf32> to vector<1x128xf32>
    %cst_28 = arith.constant dense<0.000000e+00> : vector<1x128xf32>
    %71 = tpu.matmul %68, %18, %cst_28 {dimension_numbers = #tpu.dot_dimension_numbers<[1], [0], [0], [1], [0, 0, 1, 1], [], []>} : vector<1x32xf32>, vector<32x128xf32>, vector<1x128xf32> -> vector<1x128xf32>
    %72 = arith.addf %70, %71 : vector<1x128xf32>
    %73 = math.tanh %72 : vector<1x128xf32>
    %74 = arith.negf %72 : vector<1x128xf32>
    %75 = math.exp %74 : vector<1x128xf32>
    %cst_29 = arith.constant 1.000000e+00 : f32
    %76 = vector.broadcast %cst_29 : f32 to vector<1x128xf32>
    %77 = arith.addf %76, %75 : vector<1x128xf32>
    %78 = arith.divf %76, %77 : vector<1x128xf32>
    %79 = arith.select %26, %73, %78 : vector<1x128xi1>, vector<1x128xf32>
    %80 = vector.extract_strided_slice %79 {offsets = [0, 0], sizes = [1, 32], strides = [1, 1]} : vector<1x128xf32> to vector<1x32xf32>
    %81 = vector.extract_strided_slice %79 {offsets = [0, 32], sizes = [1, 32], strides = [1, 1]} : vector<1x128xf32> to vector<1x32xf32>
    %82 = vector.extract_strided_slice %79 {offsets = [0, 64], sizes = [1, 32], strides = [1, 1]} : vector<1x128xf32> to vector<1x32xf32>
    %83 = vector.extract_strided_slice %79 {offsets = [0, 96], sizes = [1, 32], strides = [1, 1]} : vector<1x128xf32> to vector<1x32xf32>
    %84 = arith.mulf %81, %66 : vector<1x32xf32>
    %85 = arith.mulf %80, %82 : vector<1x32xf32>
    %86 = arith.addf %84, %85 : vector<1x32xf32>
    %87 = math.tanh %86 : vector<1x32xf32>
    %88 = arith.mulf %83, %87 : vector<1x32xf32>
    %c2 = arith.constant 2 : index
    %c0_30 = arith.constant 0 : index
    %89 = vector.load %arg16[%c2, %c0_30] : memref<16x32xf32, #tpu.memory_space<vmem>>, vector<1x32xf32>
    tpu.vector_store %arg16[%c2, %c0_30], %88 {strides = array<i32>} : memref<16x32xf32, #tpu.memory_space<vmem>>, vector<1x32xf32>,
    %90 = vector.extract_strided_slice %29 {offsets = [3, 0], sizes = [1, 128], strides = [1, 1]} : vector<8x128xf32> to vector<1x128xf32>
    %cst_31 = arith.constant dense<0.000000e+00> : vector<1x128xf32>
    %91 = tpu.matmul %88, %18, %cst_31 {dimension_numbers = #tpu.dot_dimension_numbers<[1], [0], [0], [1], [0, 0, 1, 1], [], []>} : vector<1x32xf32>, vector<32x128xf32>, vector<1x128xf32> -> vector<1x128xf32>
    %92 = arith.addf %90, %91 : vector<1x128xf32>
    %93 = math.tanh %92 : vector<1x128xf32>
    %94 = arith.negf %92 : vector<1x128xf32>
    %95 = math.exp %94 : vector<1x128xf32>
    %cst_32 = arith.constant 1.000000e+00 : f32
    %96 = vector.broadcast %cst_32 : f32 to vector<1x128xf32>
    %97 = arith.addf %96, %95 : vector<1x128xf32>
    %98 = arith.divf %96, %97 : vector<1x128xf32>
    %99 = arith.select %26, %93, %98 : vector<1x128xi1>, vector<1x128xf32>
    %100 = vector.extract_strided_slice %99 {offsets = [0, 0], sizes = [1, 32], strides = [1, 1]} : vector<1x128xf32> to vector<1x32xf32>
    %101 = vector.extract_strided_slice %99 {offsets = [0, 32], sizes = [1, 32], strides = [1, 1]} : vector<1x128xf32> to vector<1x32xf32>
    %102 = vector.extract_strided_slice %99 {offsets = [0, 64], sizes = [1, 32], strides = [1, 1]} : vector<1x128xf32> to vector<1x32xf32>
    %103 = vector.extract_strided_slice %99 {offsets = [0, 96], sizes = [1, 32], strides = [1, 1]} : vector<1x128xf32> to vector<1x32xf32>
    %104 = arith.mulf %101, %86 : vector<1x32xf32>
    %105 = arith.mulf %100, %102 : vector<1x32xf32>
    %106 = arith.addf %104, %105 : vector<1x32xf32>
    %107 = math.tanh %106 : vector<1x32xf32>
    %108 = arith.mulf %103, %107 : vector<1x32xf32>
    %c3 = arith.constant 3 : index
    %c0_33 = arith.constant 0 : index
    %109 = vector.load %arg16[%c3, %c0_33] : memref<16x32xf32, #tpu.memory_space<vmem>>, vector<1x32xf32>
    tpu.vector_store %arg16[%c3, %c0_33], %108 {strides = array<i32>} : memref<16x32xf32, #tpu.memory_space<vmem>>, vector<1x32xf32>,
    %110 = vector.extract_strided_slice %29 {offsets = [4, 0], sizes = [1, 128], strides = [1, 1]} : vector<8x128xf32> to vector<1x128xf32>
    %cst_34 = arith.constant dense<0.000000e+00> : vector<1x128xf32>
    %111 = tpu.matmul %108, %18, %cst_34 {dimension_numbers = #tpu.dot_dimension_numbers<[1], [0], [0], [1], [0, 0, 1, 1], [], []>} : vector<1x32xf32>, vector<32x128xf32>, vector<1x128xf32> -> vector<1x128xf32>
    %112 = arith.addf %110, %111 : vector<1x128xf32>
    %113 = math.tanh %112 : vector<1x128xf32>
    %114 = arith.negf %112 : vector<1x128xf32>
    %115 = math.exp %114 : vector<1x128xf32>
    %cst_35 = arith.constant 1.000000e+00 : f32
    %116 = vector.broadcast %cst_35 : f32 to vector<1x128xf32>
    %117 = arith.addf %116, %115 : vector<1x128xf32>
    %118 = arith.divf %116, %117 : vector<1x128xf32>
    %119 = arith.select %26, %113, %118 : vector<1x128xi1>, vector<1x128xf32>
    %120 = vector.extract_strided_slice %119 {offsets = [0, 0], sizes = [1, 32], strides = [1, 1]} : vector<1x128xf32> to vector<1x32xf32>
    %121 = vector.extract_strided_slice %119 {offsets = [0, 32], sizes = [1, 32], strides = [1, 1]} : vector<1x128xf32> to vector<1x32xf32>
    %122 = vector.extract_strided_slice %119 {offsets = [0, 64], sizes = [1, 32], strides = [1, 1]} : vector<1x128xf32> to vector<1x32xf32>
    %123 = vector.extract_strided_slice %119 {offsets = [0, 96], sizes = [1, 32], strides = [1, 1]} : vector<1x128xf32> to vector<1x32xf32>
    %124 = arith.mulf %121, %106 : vector<1x32xf32>
    %125 = arith.mulf %120, %122 : vector<1x32xf32>
    %126 = arith.addf %124, %125 : vector<1x32xf32>
    %127 = math.tanh %126 : vector<1x32xf32>
    %128 = arith.mulf %123, %127 : vector<1x32xf32>
    %c4 = arith.constant 4 : index
    %c0_36 = arith.constant 0 : index
    %129 = vector.load %arg16[%c4, %c0_36] : memref<16x32xf32, #tpu.memory_space<vmem>>, vector<1x32xf32>
    tpu.vector_store %arg16[%c4, %c0_36], %128 {strides = array<i32>} : memref<16x32xf32, #tpu.memory_space<vmem>>, vector<1x32xf32>,
    %130 = vector.extract_strided_slice %29 {offsets = [5, 0], sizes = [1, 128], strides = [1, 1]} : vector<8x128xf32> to vector<1x128xf32>
    %cst_37 = arith.constant dense<0.000000e+00> : vector<1x128xf32>
    %131 = tpu.matmul %128, %18, %cst_37 {dimension_numbers = #tpu.dot_dimension_numbers<[1], [0], [0], [1], [0, 0, 1, 1], [], []>} : vector<1x32xf32>, vector<32x128xf32>, vector<1x128xf32> -> vector<1x128xf32>
    %132 = arith.addf %130, %131 : vector<1x128xf32>
    %133 = math.tanh %132 : vector<1x128xf32>
    %134 = arith.negf %132 : vector<1x128xf32>
    %135 = math.exp %134 : vector<1x128xf32>
    %cst_38 = arith.constant 1.000000e+00 : f32
    %136 = vector.broadcast %cst_38 : f32 to vector<1x128xf32>
    %137 = arith.addf %136, %135 : vector<1x128xf32>
    %138 = arith.divf %136, %137 : vector<1x128xf32>
    %139 = arith.select %26, %133, %138 : vector<1x128xi1>, vector<1x128xf32>
    %140 = vector.extract_strided_slice %139 {offsets = [0, 0], sizes = [1, 32], strides = [1, 1]} : vector<1x128xf32> to vector<1x32xf32>
    %141 = vector.extract_strided_slice %139 {offsets = [0, 32], sizes = [1, 32], strides = [1, 1]} : vector<1x128xf32> to vector<1x32xf32>
    %142 = vector.extract_strided_slice %139 {offsets = [0, 64], sizes = [1, 32], strides = [1, 1]} : vector<1x128xf32> to vector<1x32xf32>
    %143 = vector.extract_strided_slice %139 {offsets = [0, 96], sizes = [1, 32], strides = [1, 1]} : vector<1x128xf32> to vector<1x32xf32>
    %144 = arith.mulf %141, %126 : vector<1x32xf32>
    %145 = arith.mulf %140, %142 : vector<1x32xf32>
    %146 = arith.addf %144, %145 : vector<1x32xf32>
    %147 = math.tanh %146 : vector<1x32xf32>
    %148 = arith.mulf %143, %147 : vector<1x32xf32>
    %c5 = arith.constant 5 : index
    %c0_39 = arith.constant 0 : index
    %149 = vector.load %arg16[%c5, %c0_39] : memref<16x32xf32, #tpu.memory_space<vmem>>, vector<1x32xf32>
    tpu.vector_store %arg16[%c5, %c0_39], %148 {strides = array<i32>} : memref<16x32xf32, #tpu.memory_space<vmem>>, vector<1x32xf32>,
    %150 = vector.extract_strided_slice %29 {offsets = [6, 0], sizes = [1, 128], strides = [1, 1]} : vector<8x128xf32> to vector<1x128xf32>
    %cst_40 = arith.constant dense<0.000000e+00> : vector<1x128xf32>
    %151 = tpu.matmul %148, %18, %cst_40 {dimension_numbers = #tpu.dot_dimension_numbers<[1], [0], [0], [1], [0, 0, 1, 1], [], []>} : vector<1x32xf32>, vector<32x128xf32>, vector<1x128xf32> -> vector<1x128xf32>
    %152 = arith.addf %150, %151 : vector<1x128xf32>
    %153 = math.tanh %152 : vector<1x128xf32>
    %154 = arith.negf %152 : vector<1x128xf32>
    %155 = math.exp %154 : vector<1x128xf32>
    %cst_41 = arith.constant 1.000000e+00 : f32
    %156 = vector.broadcast %cst_41 : f32 to vector<1x128xf32>
    %157 = arith.addf %156, %155 : vector<1x128xf32>
    %158 = arith.divf %156, %157 : vector<1x128xf32>
    %159 = arith.select %26, %153, %158 : vector<1x128xi1>, vector<1x128xf32>
    %160 = vector.extract_strided_slice %159 {offsets = [0, 0], sizes = [1, 32], strides = [1, 1]} : vector<1x128xf32> to vector<1x32xf32>
    %161 = vector.extract_strided_slice %159 {offsets = [0, 32], sizes = [1, 32], strides = [1, 1]} : vector<1x128xf32> to vector<1x32xf32>
    %162 = vector.extract_strided_slice %159 {offsets = [0, 64], sizes = [1, 32], strides = [1, 1]} : vector<1x128xf32> to vector<1x32xf32>
    %163 = vector.extract_strided_slice %159 {offsets = [0, 96], sizes = [1, 32], strides = [1, 1]} : vector<1x128xf32> to vector<1x32xf32>
    %164 = arith.mulf %161, %146 : vector<1x32xf32>
    %165 = arith.mulf %160, %162 : vector<1x32xf32>
    %166 = arith.addf %164, %165 : vector<1x32xf32>
    %167 = math.tanh %166 : vector<1x32xf32>
    %168 = arith.mulf %163, %167 : vector<1x32xf32>
    %c6 = arith.constant 6 : index
    %c0_42 = arith.constant 0 : index
    %169 = vector.load %arg16[%c6, %c0_42] : memref<16x32xf32, #tpu.memory_space<vmem>>, vector<1x32xf32>
    tpu.vector_store %arg16[%c6, %c0_42], %168 {strides = array<i32>} : memref<16x32xf32, #tpu.memory_space<vmem>>, vector<1x32xf32>,
    %170 = vector.extract_strided_slice %29 {offsets = [7, 0], sizes = [1, 128], strides = [1, 1]} : vector<8x128xf32> to vector<1x128xf32>
    %cst_43 = arith.constant dense<0.000000e+00> : vector<1x128xf32>
    %171 = tpu.matmul %168, %18, %cst_43 {dimension_numbers = #tpu.dot_dimension_numbers<[1], [0], [0], [1], [0, 0, 1, 1], [], []>} : vector<1x32xf32>, vector<32x128xf32>, vector<1x128xf32> -> vector<1x128xf32>
    %172 = arith.addf %170, %171 : vector<1x128xf32>
    %173 = math.tanh %172 : vector<1x128xf32>
    %174 = arith.negf %172 : vector<1x128xf32>
    %175 = math.exp %174 : vector<1x128xf32>
    %cst_44 = arith.constant 1.000000e+00 : f32
    %176 = vector.broadcast %cst_44 : f32 to vector<1x128xf32>
    %177 = arith.addf %176, %175 : vector<1x128xf32>
    %178 = arith.divf %176, %177 : vector<1x128xf32>
    %179 = arith.select %26, %173, %178 : vector<1x128xi1>, vector<1x128xf32>
    %180 = vector.extract_strided_slice %179 {offsets = [0, 0], sizes = [1, 32], strides = [1, 1]} : vector<1x128xf32> to vector<1x32xf32>
    %181 = vector.extract_strided_slice %179 {offsets = [0, 32], sizes = [1, 32], strides = [1, 1]} : vector<1x128xf32> to vector<1x32xf32>
    %182 = vector.extract_strided_slice %179 {offsets = [0, 64], sizes = [1, 32], strides = [1, 1]} : vector<1x128xf32> to vector<1x32xf32>
    %183 = vector.extract_strided_slice %179 {offsets = [0, 96], sizes = [1, 32], strides = [1, 1]} : vector<1x128xf32> to vector<1x32xf32>
    %184 = arith.mulf %181, %166 : vector<1x32xf32>
    %185 = arith.mulf %180, %182 : vector<1x32xf32>
    %186 = arith.addf %184, %185 : vector<1x32xf32>
    %187 = math.tanh %186 : vector<1x32xf32>
    %188 = arith.mulf %183, %187 : vector<1x32xf32>
    %c7 = arith.constant 7 : index
    %c0_45 = arith.constant 0 : index
    %189 = vector.load %arg16[%c7, %c0_45] : memref<16x32xf32, #tpu.memory_space<vmem>>, vector<1x32xf32>
    tpu.vector_store %arg16[%c7, %c0_45], %188 {strides = array<i32>} : memref<16x32xf32, #tpu.memory_space<vmem>>, vector<1x32xf32>,
    %c0_46 = arith.constant 0 : index
    %c0_47 = arith.constant 0 : index
    %190 = vector.load %arg14[%c0_46, %c0_47] : memref<2x32xf32, #tpu.memory_space<vmem>>, vector<1x32xf32>
    tpu.vector_store %arg14[%c0_46, %c0_47], %188 {strides = array<i32>} : memref<2x32xf32, #tpu.memory_space<vmem>>, vector<1x32xf32>,
    %c0_48 = arith.constant 0 : index
    %c0_49 = arith.constant 0 : index
    %191 = vector.load %arg15[%c0_48, %c0_49] : memref<2x32xf32, #tpu.memory_space<vmem>>, vector<1x32xf32>
    tpu.vector_store %arg15[%c0_48, %c0_49], %186 {strides = array<i32>} : memref<2x32xf32, #tpu.memory_space<vmem>>, vector<1x32xf32>,
    %192 = vector.extract_strided_slice %19 {offsets = [1, 0], sizes = [1, 32], strides = [1, 1]} : vector<2x32xf32> to vector<1x32xf32>
    %193 = vector.extract_strided_slice %20 {offsets = [1, 0], sizes = [1, 32], strides = [1, 1]} : vector<2x32xf32> to vector<1x32xf32>
    %194 = vector.extract_strided_slice %17 {offsets = [8, 0], sizes = [8, 128], strides = [1, 1]} : vector<16x128xf32> to vector<8x128xf32>
    %195 = vector.extract_strided_slice %194 {offsets = [0, 0], sizes = [1, 128], strides = [1, 1]} : vector<8x128xf32> to vector<1x128xf32>
    %cst_50 = arith.constant dense<0.000000e+00> : vector<1x128xf32>
    %196 = tpu.matmul %192, %18, %cst_50 {dimension_numbers = #tpu.dot_dimension_numbers<[1], [0], [0], [1], [0, 0, 1, 1], [], []>} : vector<1x32xf32>, vector<32x128xf32>, vector<1x128xf32> -> vector<1x128xf32>
    %197 = arith.addf %195, %196 : vector<1x128xf32>
    %198 = math.tanh %197 : vector<1x128xf32>
    %199 = arith.negf %197 : vector<1x128xf32>
    %200 = math.exp %199 : vector<1x128xf32>
    %cst_51 = arith.constant 1.000000e+00 : f32
    %201 = vector.broadcast %cst_51 : f32 to vector<1x128xf32>
    %202 = arith.addf %201, %200 : vector<1x128xf32>
    %203 = arith.divf %201, %202 : vector<1x128xf32>
    %204 = arith.select %26, %198, %203 : vector<1x128xi1>, vector<1x128xf32>
    %205 = vector.extract_strided_slice %204 {offsets = [0, 0], sizes = [1, 32], strides = [1, 1]} : vector<1x128xf32> to vector<1x32xf32>
    %206 = vector.extract_strided_slice %204 {offsets = [0, 32], sizes = [1, 32], strides = [1, 1]} : vector<1x128xf32> to vector<1x32xf32>
    %207 = vector.extract_strided_slice %204 {offsets = [0, 64], sizes = [1, 32], strides = [1, 1]} : vector<1x128xf32> to vector<1x32xf32>
    %208 = vector.extract_strided_slice %204 {offsets = [0, 96], sizes = [1, 32], strides = [1, 1]} : vector<1x128xf32> to vector<1x32xf32>
    %209 = arith.mulf %206, %193 : vector<1x32xf32>
    %210 = arith.mulf %205, %207 : vector<1x32xf32>
    %211 = arith.addf %209, %210 : vector<1x32xf32>
    %212 = math.tanh %211 : vector<1x32xf32>
    %213 = arith.mulf %208, %212 : vector<1x32xf32>
    %c8 = arith.constant 8 : index
    %c0_52 = arith.constant 0 : index
    %214 = vector.load %arg16[%c8, %c0_52] : memref<16x32xf32, #tpu.memory_space<vmem>>, vector<1x32xf32>
    tpu.vector_store %arg16[%c8, %c0_52], %213 {strides = array<i32>} : memref<16x32xf32, #tpu.memory_space<vmem>>, vector<1x32xf32>,
    %215 = vector.extract_strided_slice %194 {offsets = [1, 0], sizes = [1, 128], strides = [1, 1]} : vector<8x128xf32> to vector<1x128xf32>
    %cst_53 = arith.constant dense<0.000000e+00> : vector<1x128xf32>
    %216 = tpu.matmul %213, %18, %cst_53 {dimension_numbers = #tpu.dot_dimension_numbers<[1], [0], [0], [1], [0, 0, 1, 1], [], []>} : vector<1x32xf32>, vector<32x128xf32>, vector<1x128xf32> -> vector<1x128xf32>
    %217 = arith.addf %215, %216 : vector<1x128xf32>
    %218 = math.tanh %217 : vector<1x128xf32>
    %219 = arith.negf %217 : vector<1x128xf32>
    %220 = math.exp %219 : vector<1x128xf32>
    %cst_54 = arith.constant 1.000000e+00 : f32
    %221 = vector.broadcast %cst_54 : f32 to vector<1x128xf32>
    %222 = arith.addf %221, %220 : vector<1x128xf32>
    %223 = arith.divf %221, %222 : vector<1x128xf32>
    %224 = arith.select %26, %218, %223 : vector<1x128xi1>, vector<1x128xf32>
    %225 = vector.extract_strided_slice %224 {offsets = [0, 0], sizes = [1, 32], strides = [1, 1]} : vector<1x128xf32> to vector<1x32xf32>
    %226 = vector.extract_strided_slice %224 {offsets = [0, 32], sizes = [1, 32], strides = [1, 1]} : vector<1x128xf32> to vector<1x32xf32>
    %227 = vector.extract_strided_slice %224 {offsets = [0, 64], sizes = [1, 32], strides = [1, 1]} : vector<1x128xf32> to vector<1x32xf32>
    %228 = vector.extract_strided_slice %224 {offsets = [0, 96], sizes = [1, 32], strides = [1, 1]} : vector<1x128xf32> to vector<1x32xf32>
    %229 = arith.mulf %226, %211 : vector<1x32xf32>
    %230 = arith.mulf %225, %227 : vector<1x32xf32>
    %231 = arith.addf %229, %230 : vector<1x32xf32>
    %232 = math.tanh %231 : vector<1x32xf32>
    %233 = arith.mulf %228, %232 : vector<1x32xf32>
    %c9 = arith.constant 9 : index
    %c0_55 = arith.constant 0 : index
    %234 = vector.load %arg16[%c9, %c0_55] : memref<16x32xf32, #tpu.memory_space<vmem>>, vector<1x32xf32>
    tpu.vector_store %arg16[%c9, %c0_55], %233 {strides = array<i32>} : memref<16x32xf32, #tpu.memory_space<vmem>>, vector<1x32xf32>,
    %235 = vector.extract_strided_slice %194 {offsets = [2, 0], sizes = [1, 128], strides = [1, 1]} : vector<8x128xf32> to vector<1x128xf32>
    %cst_56 = arith.constant dense<0.000000e+00> : vector<1x128xf32>
    %236 = tpu.matmul %233, %18, %cst_56 {dimension_numbers = #tpu.dot_dimension_numbers<[1], [0], [0], [1], [0, 0, 1, 1], [], []>} : vector<1x32xf32>, vector<32x128xf32>, vector<1x128xf32> -> vector<1x128xf32>
    %237 = arith.addf %235, %236 : vector<1x128xf32>
    %238 = math.tanh %237 : vector<1x128xf32>
    %239 = arith.negf %237 : vector<1x128xf32>
    %240 = math.exp %239 : vector<1x128xf32>
    %cst_57 = arith.constant 1.000000e+00 : f32
    %241 = vector.broadcast %cst_57 : f32 to vector<1x128xf32>
    %242 = arith.addf %241, %240 : vector<1x128xf32>
    %243 = arith.divf %241, %242 : vector<1x128xf32>
    %244 = arith.select %26, %238, %243 : vector<1x128xi1>, vector<1x128xf32>
    %245 = vector.extract_strided_slice %244 {offsets = [0, 0], sizes = [1, 32], strides = [1, 1]} : vector<1x128xf32> to vector<1x32xf32>
    %246 = vector.extract_strided_slice %244 {offsets = [0, 32], sizes = [1, 32], strides = [1, 1]} : vector<1x128xf32> to vector<1x32xf32>
    %247 = vector.extract_strided_slice %244 {offsets = [0, 64], sizes = [1, 32], strides = [1, 1]} : vector<1x128xf32> to vector<1x32xf32>
    %248 = vector.extract_strided_slice %244 {offsets = [0, 96], sizes = [1, 32], strides = [1, 1]} : vector<1x128xf32> to vector<1x32xf32>
    %249 = arith.mulf %246, %231 : vector<1x32xf32>
    %250 = arith.mulf %245, %247 : vector<1x32xf32>
    %251 = arith.addf %249, %250 : vector<1x32xf32>
    %252 = math.tanh %251 : vector<1x32xf32>
    %253 = arith.mulf %248, %252 : vector<1x32xf32>
    %c10 = arith.constant 10 : index
    %c0_58 = arith.constant 0 : index
    %254 = vector.load %arg16[%c10, %c0_58] : memref<16x32xf32, #tpu.memory_space<vmem>>, vector<1x32xf32>
    tpu.vector_store %arg16[%c10, %c0_58], %253 {strides = array<i32>} : memref<16x32xf32, #tpu.memory_space<vmem>>, vector<1x32xf32>,
    %255 = vector.extract_strided_slice %194 {offsets = [3, 0], sizes = [1, 128], strides = [1, 1]} : vector<8x128xf32> to vector<1x128xf32>
    %cst_59 = arith.constant dense<0.000000e+00> : vector<1x128xf32>
    %256 = tpu.matmul %253, %18, %cst_59 {dimension_numbers = #tpu.dot_dimension_numbers<[1], [0], [0], [1], [0, 0, 1, 1], [], []>} : vector<1x32xf32>, vector<32x128xf32>, vector<1x128xf32> -> vector<1x128xf32>
    %257 = arith.addf %255, %256 : vector<1x128xf32>
    %258 = math.tanh %257 : vector<1x128xf32>
    %259 = arith.negf %257 : vector<1x128xf32>
    %260 = math.exp %259 : vector<1x128xf32>
    %cst_60 = arith.constant 1.000000e+00 : f32
    %261 = vector.broadcast %cst_60 : f32 to vector<1x128xf32>
    %262 = arith.addf %261, %260 : vector<1x128xf32>
    %263 = arith.divf %261, %262 : vector<1x128xf32>
    %264 = arith.select %26, %258, %263 : vector<1x128xi1>, vector<1x128xf32>
    %265 = vector.extract_strided_slice %264 {offsets = [0, 0], sizes = [1, 32], strides = [1, 1]} : vector<1x128xf32> to vector<1x32xf32>
    %266 = vector.extract_strided_slice %264 {offsets = [0, 32], sizes = [1, 32], strides = [1, 1]} : vector<1x128xf32> to vector<1x32xf32>
    %267 = vector.extract_strided_slice %264 {offsets = [0, 64], sizes = [1, 32], strides = [1, 1]} : vector<1x128xf32> to vector<1x32xf32>
    %268 = vector.extract_strided_slice %264 {offsets = [0, 96], sizes = [1, 32], strides = [1, 1]} : vector<1x128xf32> to vector<1x32xf32>
    %269 = arith.mulf %266, %251 : vector<1x32xf32>
    %270 = arith.mulf %265, %267 : vector<1x32xf32>
    %271 = arith.addf %269, %270 : vector<1x32xf32>
    %272 = math.tanh %271 : vector<1x32xf32>
    %273 = arith.mulf %268, %272 : vector<1x32xf32>
    %c11 = arith.constant 11 : index
    %c0_61 = arith.constant 0 : index
    %274 = vector.load %arg16[%c11, %c0_61] : memref<16x32xf32, #tpu.memory_space<vmem>>, vector<1x32xf32>
    tpu.vector_store %arg16[%c11, %c0_61], %273 {strides = array<i32>} : memref<16x32xf32, #tpu.memory_space<vmem>>, vector<1x32xf32>,
    %275 = vector.extract_strided_slice %194 {offsets = [4, 0], sizes = [1, 128], strides = [1, 1]} : vector<8x128xf32> to vector<1x128xf32>
    %cst_62 = arith.constant dense<0.000000e+00> : vector<1x128xf32>
    %276 = tpu.matmul %273, %18, %cst_62 {dimension_numbers = #tpu.dot_dimension_numbers<[1], [0], [0], [1], [0, 0, 1, 1], [], []>} : vector<1x32xf32>, vector<32x128xf32>, vector<1x128xf32> -> vector<1x128xf32>
    %277 = arith.addf %275, %276 : vector<1x128xf32>
    %278 = math.tanh %277 : vector<1x128xf32>
    %279 = arith.negf %277 : vector<1x128xf32>
    %280 = math.exp %279 : vector<1x128xf32>
    %cst_63 = arith.constant 1.000000e+00 : f32
    %281 = vector.broadcast %cst_63 : f32 to vector<1x128xf32>
    %282 = arith.addf %281, %280 : vector<1x128xf32>
    %283 = arith.divf %281, %282 : vector<1x128xf32>
    %284 = arith.select %26, %278, %283 : vector<1x128xi1>, vector<1x128xf32>
    %285 = vector.extract_strided_slice %284 {offsets = [0, 0], sizes = [1, 32], strides = [1, 1]} : vector<1x128xf32> to vector<1x32xf32>
    %286 = vector.extract_strided_slice %284 {offsets = [0, 32], sizes = [1, 32], strides = [1, 1]} : vector<1x128xf32> to vector<1x32xf32>
    %287 = vector.extract_strided_slice %284 {offsets = [0, 64], sizes = [1, 32], strides = [1, 1]} : vector<1x128xf32> to vector<1x32xf32>
    %288 = vector.extract_strided_slice %284 {offsets = [0, 96], sizes = [1, 32], strides = [1, 1]} : vector<1x128xf32> to vector<1x32xf32>
    %289 = arith.mulf %286, %271 : vector<1x32xf32>
    %290 = arith.mulf %285, %287 : vector<1x32xf32>
    %291 = arith.addf %289, %290 : vector<1x32xf32>
    %292 = math.tanh %291 : vector<1x32xf32>
    %293 = arith.mulf %288, %292 : vector<1x32xf32>
    %c12 = arith.constant 12 : index
    %c0_64 = arith.constant 0 : index
    %294 = vector.load %arg16[%c12, %c0_64] : memref<16x32xf32, #tpu.memory_space<vmem>>, vector<1x32xf32>
    tpu.vector_store %arg16[%c12, %c0_64], %293 {strides = array<i32>} : memref<16x32xf32, #tpu.memory_space<vmem>>, vector<1x32xf32>,
    %295 = vector.extract_strided_slice %194 {offsets = [5, 0], sizes = [1, 128], strides = [1, 1]} : vector<8x128xf32> to vector<1x128xf32>
    %cst_65 = arith.constant dense<0.000000e+00> : vector<1x128xf32>
    %296 = tpu.matmul %293, %18, %cst_65 {dimension_numbers = #tpu.dot_dimension_numbers<[1], [0], [0], [1], [0, 0, 1, 1], [], []>} : vector<1x32xf32>, vector<32x128xf32>, vector<1x128xf32> -> vector<1x128xf32>
    %297 = arith.addf %295, %296 : vector<1x128xf32>
    %298 = math.tanh %297 : vector<1x128xf32>
    %299 = arith.negf %297 : vector<1x128xf32>
    %300 = math.exp %299 : vector<1x128xf32>
    %cst_66 = arith.constant 1.000000e+00 : f32
    %301 = vector.broadcast %cst_66 : f32 to vector<1x128xf32>
    %302 = arith.addf %301, %300 : vector<1x128xf32>
    %303 = arith.divf %301, %302 : vector<1x128xf32>
    %304 = arith.select %26, %298, %303 : vector<1x128xi1>, vector<1x128xf32>
    %305 = vector.extract_strided_slice %304 {offsets = [0, 0], sizes = [1, 32], strides = [1, 1]} : vector<1x128xf32> to vector<1x32xf32>
    %306 = vector.extract_strided_slice %304 {offsets = [0, 32], sizes = [1, 32], strides = [1, 1]} : vector<1x128xf32> to vector<1x32xf32>
    %307 = vector.extract_strided_slice %304 {offsets = [0, 64], sizes = [1, 32], strides = [1, 1]} : vector<1x128xf32> to vector<1x32xf32>
    %308 = vector.extract_strided_slice %304 {offsets = [0, 96], sizes = [1, 32], strides = [1, 1]} : vector<1x128xf32> to vector<1x32xf32>
    %309 = arith.mulf %306, %291 : vector<1x32xf32>
    %310 = arith.mulf %305, %307 : vector<1x32xf32>
    %311 = arith.addf %309, %310 : vector<1x32xf32>
    %312 = math.tanh %311 : vector<1x32xf32>
    %313 = arith.mulf %308, %312 : vector<1x32xf32>
    %c13 = arith.constant 13 : index
    %c0_67 = arith.constant 0 : index
    %314 = vector.load %arg16[%c13, %c0_67] : memref<16x32xf32, #tpu.memory_space<vmem>>, vector<1x32xf32>
    tpu.vector_store %arg16[%c13, %c0_67], %313 {strides = array<i32>} : memref<16x32xf32, #tpu.memory_space<vmem>>, vector<1x32xf32>,
    %315 = vector.extract_strided_slice %194 {offsets = [6, 0], sizes = [1, 128], strides = [1, 1]} : vector<8x128xf32> to vector<1x128xf32>
    %cst_68 = arith.constant dense<0.000000e+00> : vector<1x128xf32>
    %316 = tpu.matmul %313, %18, %cst_68 {dimension_numbers = #tpu.dot_dimension_numbers<[1], [0], [0], [1], [0, 0, 1, 1], [], []>} : vector<1x32xf32>, vector<32x128xf32>, vector<1x128xf32> -> vector<1x128xf32>
    %317 = arith.addf %315, %316 : vector<1x128xf32>
    %318 = math.tanh %317 : vector<1x128xf32>
    %319 = arith.negf %317 : vector<1x128xf32>
    %320 = math.exp %319 : vector<1x128xf32>
    %cst_69 = arith.constant 1.000000e+00 : f32
    %321 = vector.broadcast %cst_69 : f32 to vector<1x128xf32>
    %322 = arith.addf %321, %320 : vector<1x128xf32>
    %323 = arith.divf %321, %322 : vector<1x128xf32>
    %324 = arith.select %26, %318, %323 : vector<1x128xi1>, vector<1x128xf32>
    %325 = vector.extract_strided_slice %324 {offsets = [0, 0], sizes = [1, 32], strides = [1, 1]} : vector<1x128xf32> to vector<1x32xf32>
    %326 = vector.extract_strided_slice %324 {offsets = [0, 32], sizes = [1, 32], strides = [1, 1]} : vector<1x128xf32> to vector<1x32xf32>
    %327 = vector.extract_strided_slice %324 {offsets = [0, 64], sizes = [1, 32], strides = [1, 1]} : vector<1x128xf32> to vector<1x32xf32>
    %328 = vector.extract_strided_slice %324 {offsets = [0, 96], sizes = [1, 32], strides = [1, 1]} : vector<1x128xf32> to vector<1x32xf32>
    %329 = arith.mulf %326, %311 : vector<1x32xf32>
    %330 = arith.mulf %325, %327 : vector<1x32xf32>
    %331 = arith.addf %329, %330 : vector<1x32xf32>
    %332 = math.tanh %331 : vector<1x32xf32>
    %333 = arith.mulf %328, %332 : vector<1x32xf32>
    %c14 = arith.constant 14 : index
    %c0_70 = arith.constant 0 : index
    %334 = vector.load %arg16[%c14, %c0_70] : memref<16x32xf32, #tpu.memory_space<vmem>>, vector<1x32xf32>
    tpu.vector_store %arg16[%c14, %c0_70], %333 {strides = array<i32>} : memref<16x32xf32, #tpu.memory_space<vmem>>, vector<1x32xf32>,
    %335 = vector.extract_strided_slice %194 {offsets = [7, 0], sizes = [1, 128], strides = [1, 1]} : vector<8x128xf32> to vector<1x128xf32>
    %cst_71 = arith.constant dense<0.000000e+00> : vector<1x128xf32>
    %336 = tpu.matmul %333, %18, %cst_71 {dimension_numbers = #tpu.dot_dimension_numbers<[1], [0], [0], [1], [0, 0, 1, 1], [], []>} : vector<1x32xf32>, vector<32x128xf32>, vector<1x128xf32> -> vector<1x128xf32>
    %337 = arith.addf %335, %336 : vector<1x128xf32>
    %338 = math.tanh %337 : vector<1x128xf32>
    %339 = arith.negf %337 : vector<1x128xf32>
    %340 = math.exp %339 : vector<1x128xf32>
    %cst_72 = arith.constant 1.000000e+00 : f32
    %341 = vector.broadcast %cst_72 : f32 to vector<1x128xf32>
    %342 = arith.addf %341, %340 : vector<1x128xf32>
    %343 = arith.divf %341, %342 : vector<1x128xf32>
    %344 = arith.select %26, %338, %343 : vector<1x128xi1>, vector<1x128xf32>
    %345 = vector.extract_strided_slice %344 {offsets = [0, 0], sizes = [1, 32], strides = [1, 1]} : vector<1x128xf32> to vector<1x32xf32>
    %346 = vector.extract_strided_slice %344 {offsets = [0, 32], sizes = [1, 32], strides = [1, 1]} : vector<1x128xf32> to vector<1x32xf32>
    %347 = vector.extract_strided_slice %344 {offsets = [0, 64], sizes = [1, 32], strides = [1, 1]} : vector<1x128xf32> to vector<1x32xf32>
    %348 = vector.extract_strided_slice %344 {offsets = [0, 96], sizes = [1, 32], strides = [1, 1]} : vector<1x128xf32> to vector<1x32xf32>
    %349 = arith.mulf %346, %331 : vector<1x32xf32>
    %350 = arith.mulf %345, %347 : vector<1x32xf32>
    %351 = arith.addf %349, %350 : vector<1x32xf32>
    %352 = math.tanh %351 : vector<1x32xf32>
    %353 = arith.mulf %348, %352 : vector<1x32xf32>
    %c15 = arith.constant 15 : index
    %c0_73 = arith.constant 0 : index
    %354 = vector.load %arg16[%c15, %c0_73] : memref<16x32xf32, #tpu.memory_space<vmem>>, vector<1x32xf32>
    tpu.vector_store %arg16[%c15, %c0_73], %353 {strides = array<i32>} : memref<16x32xf32, #tpu.memory_space<vmem>>, vector<1x32xf32>,
    %c1_74 = arith.constant 1 : index
    %c0_75 = arith.constant 0 : index
    %355 = vector.load %arg14[%c1_74, %c0_75] : memref<2x32xf32, #tpu.memory_space<vmem>>, vector<1x32xf32>
    tpu.vector_store %arg14[%c1_74, %c0_75], %353 {strides = array<i32>} : memref<2x32xf32, #tpu.memory_space<vmem>>, vector<1x32xf32>,
    %c1_76 = arith.constant 1 : index
    %c0_77 = arith.constant 0 : index
    %356 = vector.load %arg15[%c1_76, %c0_77] : memref<2x32xf32, #tpu.memory_space<vmem>>, vector<1x32xf32>
    tpu.vector_store %arg15[%c1_76, %c0_77], %351 {strides = array<i32>} : memref<2x32xf32, #tpu.memory_space<vmem>>, vector<1x32xf32>,
    %c0_78 = arith.constant 0 : index
    %c0_79 = arith.constant 0 : index
    %357 = vector.load %arg16[%c0_78, %c0_79] : memref<16x32xf32, #tpu.memory_space<vmem>>, vector<16x32xf32>
    %358 = math.tanh %357 : vector<16x32xf32>
    %c0_80 = arith.constant 0 : index
    %c0_81 = arith.constant 0 : index
    %359 = vector.load %arg9[%c0_80, %c0_81] : memref<32x8xf32, #tpu.memory_space<vmem>>, vector<32x8xf32>
    %cst_82 = arith.constant dense<0.000000e+00> : vector<16x8xf32>
    %360 = tpu.matmul %358, %359, %cst_82 {dimension_numbers = #tpu.dot_dimension_numbers<[1], [0], [0], [1], [0, 0, 1, 1], [], []>} : vector<16x32xf32>, vector<32x8xf32>, vector<16x8xf32> -> vector<16x8xf32>
    %c0_83 = arith.constant 0 : index
    %c0_84 = arith.constant 0 : index
    %361 = vector.load %arg10[%c0_83, %c0_84] : memref<1x8xf32, #tpu.memory_space<vmem>>, vector<1x8xf32>
    %362 = vector.broadcast %361 : vector<1x8xf32> to vector<16x8xf32>
    %363 = arith.addf %360, %362 : vector<16x8xf32>
    %c0_85 = arith.constant 0 : index
    %c0_86 = arith.constant 0 : index
    %364 = vector.load %arg1[%c0_85, %c0_86] : memref<16x8xf32, #tpu.memory_space<vmem>>, vector<16x8xf32>
    %365 = math.log %364 : vector<16x8xf32>
    %cst_87 = arith.constant -3.40282347E+38 : f32
    %366 = vector.broadcast %cst_87 : f32 to vector<16x8xf32>
    %367 = arith.maximumf %365, %366 : vector<16x8xf32>
    %368 = arith.addf %363, %367 : vector<16x8xf32>
    %c0_88 = arith.constant 0 : index
    %c0_89 = arith.constant 0 : index
    %369 = vector.load %arg13[%c0_88, %c0_89] : memref<16x8xf32, #tpu.memory_space<vmem>>, vector<16x8xf32>
    tpu.vector_store %arg13[%c0_88, %c0_89], %368 {strides = array<i32>} : memref<16x8xf32, #tpu.memory_space<vmem>>, vector<16x8xf32>,
    return
  }
}

</mosaic_0001>

<llo_original>
// kernel: rlib_lstm_forward.1
$region0: #{rlib_lstm_forward.1}
  #allocation0 [shape = 'u32[]', space=smem, size = 0x4, offset = 0x4, fixed_abs, tag = 'smem constant byte address 0x4 - core index']
  #allocation1 [shape = 'u32[144,128]{1,0:T(1,128)}', space=vmem, size = 0x12000, scoped, tag = 'internal scratch']
  #allocation2 [shape = 'f32[16,32]{1,0:T(8,128)}', space=vmem, size = 0x2000, scoped, tag = 'scratch operand']
  %s0 = inlined_call_operand.vmem [shape: f32[16,16], index: 0, kind: input, shape index: {}]
  %s1 = inlined_call_operand.vmem [shape: f32[16,8], index: 1, kind: input, shape index: {}]
  %s2 = inlined_call_operand.hbm [shape: f32[16,32], index: 2, kind: input, shape index: {}]
  %s3 = inlined_call_operand.hbm [shape: f32[1,32], index: 3, kind: input, shape index: {}]
  %s4 = inlined_call_operand.vmem [shape: f32[32,32], index: 4, kind: input, shape index: {}]
  %s5 = inlined_call_operand.hbm [shape: f32[1,32], index: 5, kind: input, shape index: {}]
  %s6 = inlined_call_operand.vmem [shape: f32[32,128], index: 6, kind: input, shape index: {}]
  %s7 = inlined_call_operand.hbm [shape: f32[32,128], index: 7, kind: input, shape index: {}]
  %s8 = inlined_call_operand.hbm [shape: f32[1,128], index: 8, kind: input, shape index: {}]
  %s9 = inlined_call_operand.vmem [shape: f32[32,8], index: 9, kind: input, shape index: {}]
  %s10 = inlined_call_operand.hbm [shape: f32[1,8], index: 10, kind: input, shape index: {}]
  %s11 = inlined_call_operand.vmem [shape: f32[2,32], index: 11, kind: input, shape index: {}]
  %s12 = inlined_call_operand.vmem [shape: f32[2,32], index: 12, kind: input, shape index: {}]
  %s13 = inlined_call_operand.vmem [shape: f32[16,8], index: 13, kind: output, shape index: {0}]
  %s14 = inlined_call_operand.hbm [shape: f32[2,32], index: 14, kind: output, shape index: {1}]
  %s15 = inlined_call_operand.hbm [shape: f32[2,32], index: 15, kind: output, shape index: {2}]
  %16 = xla_tuple %s13, %s14, %s15
  %s17 = sld [smem:[#allocation0]]
  $region102: #{rlib_lstm_forward.1} parent=0
    _
  %s19 = ssub.s32 1, %s17
  %s20 = scalar_select 0, %s19, %s17
  $region1: #{rlib_lstm_forward.1} parent=0
    #allocation3 [shape = 'u8[8192]{0}', space=vmem, size = 0x2000, scoped, tag = 'input window, operand 2, single buffered']
    #allocation4 [shape = 's32[1]{0}', space=sflag, size = 0x4, scoped, tag = 'scoped memory for rlib_lstm_forward.1']
    #allocation5 [shape = 's32[1]{0}', space=sflag, size = 0x4, scoped, tag = 'scoped memory for rlib_lstm_forward.1']
    #allocation6 [shape = 'u8[512]{0}', space=vmem, size = 0x400, scoped, tag = 'input window, operand 3, single buffered']
    #allocation7 [shape = 's32[1]{0}', space=sflag, size = 0x4, scoped, tag = 'scoped memory for rlib_lstm_forward.1']
    #allocation8 [shape = 'u8[512]{0}', space=vmem, size = 0x400, scoped, tag = 'input window, operand 5, single buffered']
    #allocation9 [shape = 'u8[16384]{0}', space=vmem, size = 0x4000, scoped, tag = 'input window, operand 7, single buffered']
    #allocation10 [shape = 's32[1]{0}', space=sflag, size = 0x4, scoped, tag = 'scoped memory for rlib_lstm_forward.1']
    #allocation11 [shape = 'u8[512]{0}', space=vmem, size = 0x400, scoped, tag = 'input window, operand 8, single buffered']
    #allocation12 [shape = 'u8[512]{0}', space=vmem, size = 0x400, scoped, tag = 'input window, operand 10, single buffered']
    #allocation13 [shape = 's32[1]{0}', space=sflag, size = 0x4, scoped, tag = 'scoped memory for rlib_lstm_forward.1']
    #allocation14 [shape = 'u8[1024]{0}', space=vmem, size = 0x400, scoped, tag = 'output window, operand 1, single buffered']
    #allocation15 [shape = 'u8[1024]{0}', space=vmem, size = 0x400, scoped, tag = 'output window, operand 2, single buffered']
    #allocation16 [shape = 's32[1]{0}', space=sflag, size = 0x4, scoped, tag = 'scoped memory for rlib_lstm_forward.1']
    %21 = vsyncpa [#allocation4], 0
    %22 = vsyncpa [#allocation7], 0
    %23 = vsyncpa [#allocation10], 0
    %24 = vsyncpa [#allocation13], 0
    %25 = vsyncpa [#allocation5], 0
    %26 = vsyncpa [#allocation16], 0
    // Predicated region
    $region2: #{rlib_lstm_forward.1} parent=1 // pred_check
      _
    $region3: #{rlib_lstm_forward.1} parent=1 // pred_check_branch
      %28 = sbr.rel (0) target = $region5
    $region4: #{rlib_lstm_forward.1} parent=1 // pred_region
      _
    $region5: #{rlib_lstm_forward.1} parent=1 // pred_fallthru
      _
    // Predicated region
    $region6: #{rlib_lstm_forward.1} parent=1 // pred_check
      _
    $region7: #{rlib_lstm_forward.1} parent=1 // pred_check_branch
      %30 = sbr.rel (0) target = $region9
    $region8: #{rlib_lstm_forward.1} parent=1 // pred_region
      _
    $region9: #{rlib_lstm_forward.1} parent=1 // pred_fallthru
      _
    // Predicated region
    $region10: #{rlib_lstm_forward.1} parent=1 // pred_check
      _
    $region11: #{rlib_lstm_forward.1} parent=1 // pred_check_branch
      %32 = sbr.rel (0) target = $region13
    $region12: #{rlib_lstm_forward.1} parent=1 // pred_region
      %s34 = ssub.s32 256, 256
      %35 = vsyncadd [#allocation4], %s34
      %s36 = sshll.u32 [#allocation3], 4
      %s37 = int_to_ptr.vmem [resolvable:$true] %s36
      %42 = dma.hbm_to_vmem [thread:$0]  %s2, 256, %s37, [#allocation4], 128, 128, 8
    $region13: #{rlib_lstm_forward.1} parent=1 // pred_fallthru
      _
    // Predicated region
    $region14: #{rlib_lstm_forward.1} parent=1 // pred_check
      _
    $region15: #{rlib_lstm_forward.1} parent=1 // pred_check_branch
      %44 = sbr.rel (0) target = $region17
    $region16: #{rlib_lstm_forward.1} parent=1 // pred_region
      %s46 = ssub.s32 16, 16
      %47 = vsyncadd [#allocation7], %s46
      %s49 = sshll.u32 [#allocation6], 4
      %s50 = int_to_ptr.vmem [resolvable:$true] %s49
      %52 = dma.hbm_to_vmem [thread:$0]  %s3, 16, %s50, [#allocation7]
    $region17: #{rlib_lstm_forward.1} parent=1 // pred_fallthru
      _
    // Predicated region
    $region18: #{rlib_lstm_forward.1} parent=1 // pred_check
      _
    $region19: #{rlib_lstm_forward.1} parent=1 // pred_check_branch
      %54 = sbr.rel (0) target = $region21
    $region20: #{rlib_lstm_forward.1} parent=1 // pred_region
      _
    $region21: #{rlib_lstm_forward.1} parent=1 // pred_fallthru
      _
    // Predicated region
    $region22: #{rlib_lstm_forward.1} parent=1 // pred_check
      _
    $region23: #{rlib_lstm_forward.1} parent=1 // pred_check_branch
      %56 = sbr.rel (0) target = $region25
    $region24: #{rlib_lstm_forward.1} parent=1 // pred_region
      %s58 = ssub.s32 16, 16
      %59 = vsyncadd [#allocation7], %s58
      %s61 = sshll.u32 [#allocation8], 4
      %s62 = int_to_ptr.vmem [resolvable:$true] %s61
      %64 = dma.hbm_to_vmem [thread:$0]  %s5, 16, %s62, [#allocation7]
    $region25: #{rlib_lstm_forward.1} parent=1 // pred_fallthru
      _
    // Predicated region
    $region26: #{rlib_lstm_forward.1} parent=1 // pred_check
      _
    $region27: #{rlib_lstm_forward.1} parent=1 // pred_check_branch
      %66 = sbr.rel (0) target = $region29
    $region28: #{rlib_lstm_forward.1} parent=1 // pred_region
      _
    $region29: #{rlib_lstm_forward.1} parent=1 // pred_fallthru
      _
    // Predicated region
    $region30: #{rlib_lstm_forward.1} parent=1 // pred_check
      _
    $region31: #{rlib_lstm_forward.1} parent=1 // pred_check_branch
      %68 = sbr.rel (0) target = $region33
    $region32: #{rlib_lstm_forward.1} parent=1 // pred_region
      %s70 = ssub.s32 512, 512
      %71 = vsyncadd [#allocation10], %s70
      %s72 = sshll.u32 [#allocation9], 4
      %s73 = int_to_ptr.vmem [resolvable:$true] %s72
      %78 = dma.hbm_to_vmem [thread:$0]  %s7, 512, %s73, [#allocation10], 128, 128, 8
    $region33: #{rlib_lstm_forward.1} parent=1 // pred_fallthru
      _
    // Predicated region
    $region34: #{rlib_lstm_forward.1} parent=1 // pred_check
      _
    $region35: #{rlib_lstm_forward.1} parent=1 // pred_check_branch
      %80 = sbr.rel (0) target = $region37
    $region36: #{rlib_lstm_forward.1} parent=1 // pred_region
      %s82 = ssub.s32 16, 16
      %83 = vsyncadd [#allocation10], %s82
      %s85 = sshll.u32 [#allocation11], 4
      %s86 = int_to_ptr.vmem [resolvable:$true] %s85
      %88 = dma.hbm_to_vmem [thread:$0]  %s8, 16, %s86, [#allocation10]
    $region37: #{rlib_lstm_forward.1} parent=1 // pred_fallthru
      _
    // Predicated region
    $region38: #{rlib_lstm_forward.1} parent=1 // pred_check
      _
    $region39: #{rlib_lstm_forward.1} parent=1 // pred_check_branch
      %90 = sbr.rel (0) target = $region41
    $region40: #{rlib_lstm_forward.1} parent=1 // pred_region
      _
    $region41: #{rlib_lstm_forward.1} parent=1 // pred_fallthru
      _
    // Predicated region
    $region42: #{rlib_lstm_forward.1} parent=1 // pred_check
      _
    $region43: #{rlib_lstm_forward.1} parent=1 // pred_check_branch
      %92 = sbr.rel (0) target = $region45
    $region44: #{rlib_lstm_forward.1} parent=1 // pred_region
      %s94 = ssub.s32 16, 16
      %95 = vsyncadd [#allocation13], %s94
      %s97 = sshll.u32 [#allocation12], 4
      %s98 = int_to_ptr.vmem [resolvable:$true] %s97
      %100 = dma.hbm_to_vmem [thread:$0]  %s10, 16, %s98, [#allocation13]
    $region45: #{rlib_lstm_forward.1} parent=1 // pred_fallthru
      _
    // Predicated region
    $region46: #{rlib_lstm_forward.1} parent=1 // pred_check
      _
    $region47: #{rlib_lstm_forward.1} parent=1 // pred_check_branch
      %102 = sbr.rel (0) target = $region49
    $region48: #{rlib_lstm_forward.1} parent=1 // pred_region
      _
    $region49: #{rlib_lstm_forward.1} parent=1 // pred_fallthru
      _
    // Predicated region
    $region50: #{rlib_lstm_forward.1} parent=1 // pred_check
      _
    $region51: #{rlib_lstm_forward.1} parent=1 // pred_check_branch
      %104 = sbr.rel (0) target = $region53
    $region52: #{rlib_lstm_forward.1} parent=1 // pred_region
      _
    $region53: #{rlib_lstm_forward.1} parent=1 // pred_fallthru
      _
    // Predicated region
    $region54: #{rlib_lstm_forward.1} parent=1 // pred_check
      _
    $region55: #{rlib_lstm_forward.1} parent=1 // pred_check_branch
      %106 = sbr.rel (0) target = $region57
    $region56: #{rlib_lstm_forward.1} parent=1 // pred_region
      %107 = dma.done [#allocation4], 256
    $region57: #{rlib_lstm_forward.1} parent=1 // pred_fallthru
      _
    // Predicated region
    $region58: #{rlib_lstm_forward.1} parent=1 // pred_check
      _
    $region59: #{rlib_lstm_forward.1} parent=1 // pred_check_branch
      %109 = sbr.rel (0) target = $region61
    $region60: #{rlib_lstm_forward.1} parent=1 // pred_region
      %110 = dma.done [#allocation7], 16
    $region61: #{rlib_lstm_forward.1} parent=1 // pred_fallthru
      _
    // Predicated region
    $region62: #{rlib_lstm_forward.1} parent=1 // pred_check
      _
    $region63: #{rlib_lstm_forward.1} parent=1 // pred_check_branch
      %112 = sbr.rel (0) target = $region65
    $region64: #{rlib_lstm_forward.1} parent=1 // pred_region
      %113 = dma.done [#allocation7], 16
    $region65: #{rlib_lstm_forward.1} parent=1 // pred_fallthru
      _
    // Predicated region
    $region66: #{rlib_lstm_forward.1} parent=1 // pred_check
      _
    $region67: #{rlib_lstm_forward.1} parent=1 // pred_check_branch
      %115 = sbr.rel (0) target = $region69
    $region68: #{rlib_lstm_forward.1} parent=1 // pred_region
      %116 = dma.done [#allocation10], 512
    $region69: #{rlib_lstm_forward.1} parent=1 // pred_fallthru
      _
    // Predicated region
    $region70: #{rlib_lstm_forward.1} parent=1 // pred_check
      _
    $region71: #{rlib_lstm_forward.1} parent=1 // pred_check_branch
      %118 = sbr.rel (0) target = $region73
    $region72: #{rlib_lstm_forward.1} parent=1 // pred_region
      %119 = dma.done [#allocation10], 16
    $region73: #{rlib_lstm_forward.1} parent=1 // pred_fallthru
      _
    // Predicated region
    $region74: #{rlib_lstm_forward.1} parent=1 // pred_check
      _
    $region75: #{rlib_lstm_forward.1} parent=1 // pred_check_branch
      %121 = sbr.rel (0) target = $region77
    $region76: #{rlib_lstm_forward.1} parent=1 // pred_region
      %122 = dma.done [#allocation13], 16
    $region77: #{rlib_lstm_forward.1} parent=1 // pred_fallthru
      _
    %v123 = vld [vmem:[%s0] sm:$0xff]
    %v124 = vld [vmem:[%s0 + $0x8] sm:$0xff]
    %v125 = vld [vmem:[#allocation3] sm:$0xff]
    %v126 = vld [vmem:[#allocation3 + $0x8] sm:$0xff]
    %v127 = vld [vmem:[#allocation6] sm:$0x1]
    %v129 = vlaneseq
    %v130 = vshrl.u32 %v129, 7
    %v131 = vsub.s32 0, %v130
    %v132 = vrot.slane %v127, %v131
    %vm134 = vcmask 130048
    %v136 = vsel %vm134, %v123, 0
    %v139 = vsel %vm134, %v124, 0
    %141 = vmatprep.subr.mxu0 0.0
    %142 = vmatpush1.msra.mxu0 0.0
    %143 = vmatprep.subr.mxu0 0.0
    %144 = vmatpush1.msra.mxu0 0.0
    %145 = vmatprep.subr.mxu0 0.0
    %146 = vmatpush1.msra.mxu0 0.0
    %147 = vmatprep.subr.mxu0 0.0
    %148 = vmatpush1.msra.mxu0 0.0
    %149 = vmatprep.subr.mxu0 0.0
    %150 = vmatpush1.msra.mxu0 0.0
    %151 = vmatprep.subr.mxu0 0.0
    %152 = vmatpush1.msra.mxu0 0.0
    %153 = vmatprep.subr.mxu0 0.0
    %154 = vmatpush1.msra.mxu0 0.0
    %155 = vmatprep.subr.mxu0 0.0
    %156 = vmatpush1.msra.mxu0 0.0
    %157 = vmatprep.subr.mxu0 0.0
    %158 = vmatpush1.msra.mxu0 0.0
    %159 = vmatprep.subr.mxu0 0.0
    %160 = vmatpush1.msra.mxu0 0.0
    %161 = vmatprep.subr.mxu0 0.0
    %162 = vmatpush1.msra.mxu0 0.0
    %163 = vmatprep.subr.mxu0 0.0
    %164 = vmatpush1.msra.mxu0 0.0
    %165 = vmatprep.subr.mxu0 0.0
    %166 = vmatpush1.msra.mxu0 0.0
    %167 = vmatprep.subr.mxu0 0.0
    %168 = vmatpush1.msra.mxu0 0.0
    %169 = vmatprep.subr.mxu0 0.0
    %170 = vmatpush1.msra.mxu0 %v126
    %171 = vmatprep.subr.mxu0 0.0
    %172 = vmatpush1.msra.mxu0 %v125
    %173 = vmatprep.subr.mxu0 0.0
    %174 = vmatpush2.msra.mxu0 0.0
    %175 = vmatprep.subr.mxu0 0.0
    %176 = vmatpush2.msra.mxu0 0.0
    %177 = vmatprep.subr.mxu0 0.0
    %178 = vmatpush2.msra.mxu0 0.0
    %179 = vmatprep.subr.mxu0 0.0
    %180 = vmatpush2.msra.mxu0 0.0
    %181 = vmatprep.subr.mxu0 0.0
    %182 = vmatpush2.msra.mxu0 0.0
    %183 = vmatprep.subr.mxu0 0.0
    %184 = vmatpush2.msra.mxu0 0.0
    %185 = vmatprep.subr.mxu0 0.0
    %186 = vmatpush2.msra.mxu0 0.0
    %187 = vmatprep.subr.mxu0 0.0
    %188 = vmatpush2.msra.mxu0 0.0
    %189 = vmatprep.subr.mxu0 0.0
    %190 = vmatpush2.msra.mxu0 0.0
    %191 = vmatprep.subr.mxu0 0.0
    %192 = vmatpush2.msra.mxu0 0.0
    %193 = vmatprep.subr.mxu0 0.0
    %194 = vmatpush2.msra.mxu0 0.0
    %195 = vmatprep.subr.mxu0 0.0
    %196 = vmatpush2.msra.mxu0 0.0
    %197 = vmatprep.subr.mxu0 0.0
    %198 = vmatpush2.msra.mxu0 0.0
    %199 = vmatprep.subr.mxu0 0.0
    %200 = vmatpush2.msra.mxu0 0.0
    %201 = vmatprep.subr.mxu0 0.0
    %202 = vmatpush2.msra.mxu0 0.0
    %203 = vmatprep.subr.mxu0 0.0
    %204 = vmatpush2.msra.mxu0 0.0
    %205 = vmatprep.mubr.f32.mxu0 0.0
    %206 = vmatmul.mubr.f32.gmra.mxu0 %v136
    %v207 = vpop.f32.mrf.mxu0
    %v208 = vadd.f32 %v132, %v207
    %v209 = vpop.f32.mrf.mxu0
    %210 = vmatprep.mubr.f32.mxu0 0.0
    %211 = vmatmul.mubr.f32.gmra.mxu0 %v139
    %v212 = vpop.f32.mrf.mxu0
    %v213 = vadd.f32 %v132, %v212
    %v214 = vpop.f32.mrf.mxu0
    %215 = vdwg.mxu0
    %v216 = vtanh.pop %v208
    %v217 = vtanh.pop %v213
    %v218 = vld [vmem:[%s4] sm:$0xff]
    %v219 = vld [vmem:[%s4 + $0x8] sm:$0xff]
    %v220 = vld [vmem:[%s4 + $0x10] sm:$0xff]
    %v221 = vld [vmem:[%s4 + $0x18] sm:$0xff]
    %v222 = vld [vmem:[#allocation8] sm:$0x1]
    %v224 = vlaneseq
    %v225 = vshrl.u32 %v224, 7
    %v226 = vsub.s32 0, %v225
    %v227 = vrot.slane %v222, %v226
    %vm229 = vcmask 261120
    %v231 = vsel %vm229, %v216, 0
    %v234 = vsel %vm229, %v217, 0
    %236 = vmatprep.subr.mxu0 0.0
    %237 = vmatpush1.msra.mxu0 0.0
    %238 = vmatprep.subr.mxu0 0.0
    %239 = vmatpush1.msra.mxu0 0.0
    %240 = vmatprep.subr.mxu0 0.0
    %241 = vmatpush1.msra.mxu0 0.0
    %242 = vmatprep.subr.mxu0 0.0
    %243 = vmatpush1.msra.mxu0 0.0
    %244 = vmatprep.subr.mxu0 0.0
    %245 = vmatpush1.msra.mxu0 0.0
    %246 = vmatprep.subr.mxu0 0.0
    %247 = vmatpush1.msra.mxu0 0.0
    %248 = vmatprep.subr.mxu0 0.0
    %249 = vmatpush1.msra.mxu0 0.0
    %250 = vmatprep.subr.mxu0 0.0
    %251 = vmatpush1.msra.mxu0 0.0
    %252 = vmatprep.subr.mxu0 0.0
    %253 = vmatpush1.msra.mxu0 0.0
    %254 = vmatprep.subr.mxu0 0.0
    %255 = vmatpush1.msra.mxu0 0.0
    %256 = vmatprep.subr.mxu0 0.0
    %257 = vmatpush1.msra.mxu0 0.0
    %258 = vmatprep.subr.mxu0 0.0
    %259 = vmatpush1.msra.mxu0 0.0
    %260 = vmatprep.subr.mxu0 0.0
    %261 = vmatpush1.msra.mxu0 %v221
    %262 = vmatprep.subr.mxu0 0.0
    %263 = vmatpush1.msra.mxu0 %v220
    %264 = vmatprep.subr.mxu0 0.0
    %265 = vmatpush1.msra.mxu0 %v219
    %266 = vmatprep.subr.mxu0 0.0
    %267 = vmatpush1.msra.mxu0 %v218
    %268 = vmatprep.subr.mxu0 0.0
    %269 = vmatpush2.msra.mxu0 0.0
    %270 = vmatprep.subr.mxu0 0.0
    %271 = vmatpush2.msra.mxu0 0.0
    %272 = vmatprep.subr.mxu0 0.0
    %273 = vmatpush2.msra.mxu0 0.0
    %274 = vmatprep.subr.mxu0 0.0
    %275 = vmatpush2.msra.mxu0 0.0
    %276 = vmatprep.subr.mxu0 0.0
    %277 = vmatpush2.msra.mxu0 0.0
    %278 = vmatprep.subr.mxu0 0.0
    %279 = vmatpush2.msra.mxu0 0.0
    %280 = vmatprep.subr.mxu0 0.0
    %281 = vmatpush2.msra.mxu0 0.0
    %282 = vmatprep.subr.mxu0 0.0
    %283 = vmatpush2.msra.mxu0 0.0
    %284 = vmatprep.subr.mxu0 0.0
    %285 = vmatpush2.msra.mxu0 0.0
    %286 = vmatprep.subr.mxu0 0.0
    %287 = vmatpush2.msra.mxu0 0.0
    %288 = vmatprep.subr.mxu0 0.0
    %289 = vmatpush2.msra.mxu0 0.0
    %290 = vmatprep.subr.mxu0 0.0
    %291 = vmatpush2.msra.mxu0 0.0
    %292 = vmatprep.subr.mxu0 0.0
    %293 = vmatpush2.msra.mxu0 0.0
    %294 = vmatprep.subr.mxu0 0.0
    %295 = vmatpush2.msra.mxu0 0.0
    %296 = vmatprep.subr.mxu0 0.0
    %297 = vmatpush2.msra.mxu0 0.0
    %298 = vmatprep.subr.mxu0 0.0
    %299 = vmatpush2.msra.mxu0 0.0
    %300 = vmatprep.mubr.f32.mxu0 0.0
    %301 = vmatmul.mubr.f32.gmra.mxu0 %v231
    %v302 = vpop.f32.mrf.mxu0
    %v303 = vadd.f32 %v227, %v302
    %v304 = vpop.f32.mrf.mxu0
    %305 = vmatprep.mubr.f32.mxu0 0.0
    %306 = vmatmul.mubr.f32.gmra.mxu0 %v234
    %v307 = vpop.f32.mrf.mxu0
    %v308 = vadd.f32 %v227, %v307
    %v309 = vpop.f32.mrf.mxu0
    %310 = vdwg.mxu0
    %v311 = vtanh.pop %v303
    %v312 = vtanh.pop %v308
    %v313 = vld [vmem:[%s6] sm:$0xff]
    %v314 = vld [vmem:[%s6 + $0x8] sm:$0xff]
    %v315 = vld [vmem:[%s6 + $0x10] sm:$0xff]
    %v316 = vld [vmem:[%s6 + $0x18] sm:$0xff]
    %v317 = vld [vmem:[#allocation11] sm:$0x1]
    %v319 = vlaneseq
    %v320 = vshrl.u32 %v319, 7
    %v321 = vsub.s32 0, %v320
    %v322 = vrot.slane %v317, %v321
    %v325 = vsel %vm229, %v311, 0
    %v328 = vsel %vm229, %v312, 0
    %330 = vmatprep.subr.mxu0 0.0
    %331 = vmatpush1.msra.mxu0 0.0
    %332 = vmatprep.subr.mxu0 0.0
    %333 = vmatpush1.msra.mxu0 0.0
    %334 = vmatprep.subr.mxu0 0.0
    %335 = vmatpush1.msra.mxu0 0.0
    %336 = vmatprep.subr.mxu0 0.0
    %337 = vmatpush1.msra.mxu0 0.0
    %338 = vmatprep.subr.mxu0 0.0
    %339 = vmatpush1.msra.mxu0 0.0
    %340 = vmatprep.subr.mxu0 0.0
    %341 = vmatpush1.msra.mxu0 0.0
    %342 = vmatprep.subr.mxu0 0.0
    %343 = vmatpush1.msra.mxu0 0.0
    %344 = vmatprep.subr.mxu0 0.0
    %345 = vmatpush1.msra.mxu0 0.0
    %346 = vmatprep.subr.mxu0 0.0
    %347 = vmatpush1.msra.mxu0 0.0
    %348 = vmatprep.subr.mxu0 0.0
    %349 = vmatpush1.msra.mxu0 0.0
    %350 = vmatprep.subr.mxu0 0.0
    %351 = vmatpush1.msra.mxu0 0.0
    %352 = vmatprep.subr.mxu0 0.0
    %353 = vmatpush1.msra.mxu0 0.0
    %354 = vmatprep.subr.mxu0 0.0
    %355 = vmatpush1.msra.mxu0 %v316
    %356 = vmatprep.subr.mxu0 0.0
    %357 = vmatpush1.msra.mxu0 %v315
    %358 = vmatprep.subr.mxu0 0.0
    %359 = vmatpush1.msra.mxu0 %v314
    %360 = vmatprep.subr.mxu0 0.0
    %361 = vmatpush1.msra.mxu0 %v313
    %362 = vmatprep.subr.mxu0 0.0
    %363 = vmatpush2.msra.mxu0 0.0
    %364 = vmatprep.subr.mxu0 0.0
    %365 = vmatpush2.msra.mxu0 0.0
    %366 = vmatprep.subr.mxu0 0.0
    %367 = vmatpush2.msra.mxu0 0.0
    %368 = vmatprep.subr.mxu0 0.0
    %369 = vmatpush2.msra.mxu0 0.0
    %370 = vmatprep.subr.mxu0 0.0
    %371 = vmatpush2.msra.mxu0 0.0
    %372 = vmatprep.subr.mxu0 0.0
    %373 = vmatpush2.msra.mxu0 0.0
    %374 = vmatprep.subr.mxu0 0.0
    %375 = vmatpush2.msra.mxu0 0.0
    %376 = vmatprep.subr.mxu0 0.0
    %377 = vmatpush2.msra.mxu0 0.0
    %378 = vmatprep.subr.mxu0 0.0
    %379 = vmatpush2.msra.mxu0 0.0
    %380 = vmatprep.subr.mxu0 0.0
    %381 = vmatpush2.msra.mxu0 0.0
    %382 = vmatprep.subr.mxu0 0.0
    %383 = vmatpush2.msra.mxu0 0.0
    %384 = vmatprep.subr.mxu0 0.0
    %385 = vmatpush2.msra.mxu0 0.0
    %386 = vmatprep.subr.mxu0 0.0
    %387 = vmatpush2.msra.mxu0 0.0
    %388 = vmatprep.subr.mxu0 0.0
    %389 = vmatpush2.msra.mxu0 0.0
    %390 = vmatprep.subr.mxu0 0.0
    %391 = vmatpush2.msra.mxu0 0.0
    %392 = vmatprep.subr.mxu0 0.0
    %393 = vmatpush2.msra.mxu0 0.0
    %394 = vmatprep.mubr.f32.mxu0 0.0
    %395 = vmatmul.mubr.f32.gmra.mxu0 %v325
    %v396 = vpop.f32.mrf.mxu0
    %v397 = vadd.f32 %v322, %v396
    %v398 = vpop.f32.mrf.mxu0
    %399 = vmatprep.mubr.f32.mxu0 0.0
    %400 = vmatmul.mubr.f32.gmra.mxu0 %v328
    %v401 = vpop.f32.mrf.mxu0
    %v402 = vadd.f32 %v322, %v401
    %v403 = vpop.f32.mrf.mxu0
    %404 = vdwg.mxu0
    %v405 = vld [vmem:[#allocation9] sm:$0xff]
    %v406 = vld [vmem:[#allocation9 + $0x8] sm:$0xff]
    %v407 = vld [vmem:[#allocation9 + $0x10] sm:$0xff]
    %v408 = vld [vmem:[#allocation9 + $0x18] sm:$0xff]
    %v409 = vld [vmem:[%s11] sm:$0x3]
    %v410 = vld [vmem:[%s12] sm:$0x3]
    %v411 = vlaneseq
    %v412 = vand.u32 %v411, 127
    %vm413 = vcmp.ge.s32.totalorder %v412, 64
    %vm414 = vcmp.lt.s32.totalorder %v412, 96
    %vm415 = vmand %vm413, %vm414
    %v417 = vsel %vm229, %v409, 0
    %419 = vmatprep.subr.mxu0 0.0
    %420 = vmatpush1.msra.mxu0 0.0
    %421 = vmatprep.subr.mxu0 0.0
    %422 = vmatpush1.msra.mxu0 0.0
    %423 = vmatprep.subr.mxu0 0.0
    %424 = vmatpush1.msra.mxu0 0.0
    %425 = vmatprep.subr.mxu0 0.0
    %426 = vmatpush1.msra.mxu0 0.0
    %427 = vmatprep.subr.mxu0 0.0
    %428 = vmatpush1.msra.mxu0 0.0
    %429 = vmatprep.subr.mxu0 0.0
    %430 = vmatpush1.msra.mxu0 0.0
    %431 = vmatprep.subr.mxu0 0.0
    %432 = vmatpush1.msra.mxu0 0.0
    %433 = vmatprep.subr.mxu0 0.0
    %434 = vmatpush1.msra.mxu0 0.0
    %435 = vmatprep.subr.mxu0 0.0
    %436 = vmatpush1.msra.mxu0 0.0
    %437 = vmatprep.subr.mxu0 0.0
    %438 = vmatpush1.msra.mxu0 0.0
    %439 = vmatprep.subr.mxu0 0.0
    %440 = vmatpush1.msra.mxu0 0.0
    %441 = vmatprep.subr.mxu0 0.0
    %442 = vmatpush1.msra.mxu0 0.0
    %443 = vmatprep.subr.mxu0 0.0
    %444 = vmatpush1.msra.mxu0 %v408
    %445 = vmatprep.subr.mxu0 0.0
    %446 = vmatpush1.msra.mxu0 %v407
    %447 = vmatprep.subr.mxu0 0.0
    %448 = vmatpush1.msra.mxu0 %v406
    %449 = vmatprep.subr.mxu0 0.0
    %450 = vmatpush1.msra.mxu0 %v405
    %451 = vmatprep.subr.mxu0 0.0
    %452 = vmatpush2.msra.mxu0 0.0
    %453 = vmatprep.subr.mxu0 0.0
    %454 = vmatpush2.msra.mxu0 0.0
    %455 = vmatprep.subr.mxu0 0.0
    %456 = vmatpush2.msra.mxu0 0.0
    %457 = vmatprep.subr.mxu0 0.0
    %458 = vmatpush2.msra.mxu0 0.0
    %459 = vmatprep.subr.mxu0 0.0
    %460 = vmatpush2.msra.mxu0 0.0
    %461 = vmatprep.subr.mxu0 0.0
    %462 = vmatpush2.msra.mxu0 0.0
    %463 = vmatprep.subr.mxu0 0.0
    %464 = vmatpush2.msra.mxu0 0.0
    %465 = vmatprep.subr.mxu0 0.0
    %466 = vmatpush2.msra.mxu0 0.0
    %467 = vmatprep.subr.mxu0 0.0
    %468 = vmatpush2.msra.mxu0 0.0
    %469 = vmatprep.subr.mxu0 0.0
    %470 = vmatpush2.msra.mxu0 0.0
    %471 = vmatprep.subr.mxu0 0.0
    %472 = vmatpush2.msra.mxu0 0.0
    %473 = vmatprep.subr.mxu0 0.0
    %474 = vmatpush2.msra.mxu0 0.0
    %475 = vmatprep.subr.mxu0 0.0
    %476 = vmatpush2.msra.mxu0 0.0
    %477 = vmatprep.subr.mxu0 0.0
    %478 = vmatpush2.msra.mxu0 0.0
    %479 = vmatprep.subr.mxu0 0.0
    %480 = vmatpush2.msra.mxu0 0.0
    %481 = vmatprep.subr.mxu0 0.0
    %482 = vmatpush2.msra.mxu0 0.0
    %483 = vmatprep.mubr.f32.mxu0 0.0
    %484 = vmatmul.mubr.f32.gmra.mxu0 %v417
    %v485 = vpop.f32.mrf.mxu0
    %v486 = vadd.f32 0.0, %v485
    %v487 = vpop.f32.mrf.mxu0
    %488 = vdwg.mxu0
    %v489 = vadd.f32 %v397, %v486
    %v490 = vtanh.pop %v489
    %v491 = vxor.u32 %v489, 2147483648
    %v492 = vmul.f32 %v491, 1.442695
    %v493 = vpow.pop %v492
    %v494 = vadd.f32 %v493, 1.0
    %v495 = vrcp.pop %v494
    %v496 = vmul.f32 1.0, %v495
    %v497 = vsel %vm415, %v490, %v496
    %499 = vrot.lane.b32.xlu0 %v410, 32
    %v500 = vpop.permute.xlu0 %499
    %v502 = vmul.f32 %v497, %v500
    %504 = vrot.lane.b32.xlu0 %v497, 64
    %v505 = vpop.permute.xlu0 %504
    %v507 = vmul.f32 %v497, %v505
    %509 = vrot.lane.b32.xlu0 %v507, 32
    %v510 = vpop.permute.xlu0 %509
    %v512 = vadd.f32 %v502, %v510
    %v513 = vtanh.pop %v512
    %515 = vrot.lane.b32.xlu0 %v513, 64
    %v516 = vpop.permute.xlu0 %515
    %v518 = vmul.f32 %v497, %v516
    %520 = vrot.lane.b32.xlu0 %v518, 32
    %v521 = vpop.permute.xlu0 %520
    %vm523 = vcmask 253952
    %524 = vst.msk [vmem:[#allocation2] sm:$0x1] %vm523, %v521
    %v525 = vsel %vm229, %v521, 0
    %527 = vmatprep.subr.mxu0 0.0
    %528 = vmatpush1.msra.mxu0 0.0
    %529 = vmatprep.subr.mxu0 0.0
    %530 = vmatpush1.msra.mxu0 0.0
    %531 = vmatprep.subr.mxu0 0.0
    %532 = vmatpush1.msra.mxu0 0.0
    %533 = vmatprep.subr.mxu0 0.0
    %534 = vmatpush1.msra.mxu0 0.0
    %535 = vmatprep.subr.mxu0 0.0
    %536 = vmatpush1.msra.mxu0 0.0
    %537 = vmatprep.subr.mxu0 0.0
    %538 = vmatpush1.msra.mxu0 0.0
    %539 = vmatprep.subr.mxu0 0.0
    %540 = vmatpush1.msra.mxu0 0.0
    %541 = vmatprep.subr.mxu0 0.0
    %542 = vmatpush1.msra.mxu0 0.0
    %543 = vmatprep.subr.mxu0 0.0
    %544 = vmatpush1.msra.mxu0 0.0
    %545 = vmatprep.subr.mxu0 0.0
    %546 = vmatpush1.msra.mxu0 0.0
    %547 = vmatprep.subr.mxu0 0.0
    %548 = vmatpush1.msra.mxu0 0.0
    %549 = vmatprep.subr.mxu0 0.0
    %550 = vmatpush1.msra.mxu0 0.0
    %551 = vmatprep.subr.mxu0 0.0
    %552 = vmatpush1.msra.mxu0 %v408
    %553 = vmatprep.subr.mxu0 0.0
    %554 = vmatpush1.msra.mxu0 %v407
    %555 = vmatprep.subr.mxu0 0.0
    %556 = vmatpush1.msra.mxu0 %v406
    %557 = vmatprep.subr.mxu0 0.0
    %558 = vmatpush1.msra.mxu0 %v405
    %559 = vmatprep.subr.mxu0 0.0
    %560 = vmatpush2.msra.mxu0 0.0
    %561 = vmatprep.subr.mxu0 0.0
    %562 = vmatpush2.msra.mxu0 0.0
    %563 = vmatprep.subr.mxu0 0.0
    %564 = vmatpush2.msra.mxu0 0.0
    %565 = vmatprep.subr.mxu0 0.0
    %566 = vmatpush2.msra.mxu0 0.0
    %567 = vmatprep.subr.mxu0 0.0
    %568 = vmatpush2.msra.mxu0 0.0
    %569 = vmatprep.subr.mxu0 0.0
    %570 = vmatpush2.msra.mxu0 0.0
    %571 = vmatprep.subr.mxu0 0.0
    %572 = vmatpush2.msra.mxu0 0.0
    %573 = vmatprep.subr.mxu0 0.0
    %574 = vmatpush2.msra.mxu0 0.0
    %575 = vmatprep.subr.mxu0 0.0
    %576 = vmatpush2.msra.mxu0 0.0
    %577 = vmatprep.subr.mxu0 0.0
    %578 = vmatpush2.msra.mxu0 0.0
    %579 = vmatprep.subr.mxu0 0.0
    %580 = vmatpush2.msra.mxu0 0.0
    %581 = vmatprep.subr.mxu0 0.0
    %582 = vmatpush2.msra.mxu0 0.0
    %583 = vmatprep.subr.mxu0 0.0
    %584 = vmatpush2.msra.mxu0 0.0
    %585 = vmatprep.subr.mxu0 0.0
    %586 = vmatpush2.msra.mxu0 0.0
    %587 = vmatprep.subr.mxu0 0.0
    %588 = vmatpush2.msra.mxu0 0.0
    %589 = vmatprep.subr.mxu0 0.0
    %590 = vmatpush2.msra.mxu0 0.0
    %591 = vmatprep.mubr.f32.mxu0 0.0
    %592 = vmatmul.mubr.f32.gmra.mxu0 %v525
    %v593 = vpop.f32.mrf.mxu0
    %v594 = vadd.f32 0.0, %v593
    %v595 = vpop.f32.mrf.mxu0
    %596 = vdwg.mxu0
    %v598 = vrot.slane %v594, 7
    %v600 = vadd.f32 %v397, %v598
    %v601 = vtanh.pop %v600
    %v602 = vxor.u32 %v600, 2147483648
    %v603 = vmul.f32 %v602, 1.442695
    %v604 = vpow.pop %v603
    %v605 = vadd.f32 %v604, 1.0
    %v606 = vrcp.pop %v605
    %v607 = vmul.f32 1.0, %v606
    %v608 = vsel %vm415, %v601, %v607
    %v610 = vrot.slane %v512, 7
    %v612 = vmul.f32 %v608, %v610
    %614 = vrot.lane.b32.xlu0 %v608, 64
    %v615 = vpop.permute.xlu0 %614
    %v617 = vmul.f32 %v608, %v615
    %619 = vrot.lane.b32.xlu0 %v617, 32
    %v620 = vpop.permute.xlu0 %619
    %v622 = vadd.f32 %v612, %v620
    %v623 = vtanh.pop %v622
    %625 = vrot.lane.b32.xlu0 %v623, 64
    %v626 = vpop.permute.xlu0 %625
    %v628 = vmul.f32 %v608, %v626
    %630 = vrot.lane.b32.xlu0 %v628, 32
    %v631 = vpop.permute.xlu0 %630
    %vm633 = vcmask 254977
    %634 = vst.msk [vmem:[#allocation2] sm:$0x2] %vm633, %v631
    %v635 = vrot.slane %v628, 1
    %636 = vrot.lane.b32.xlu0 %v635, 32
    %v637 = vpop.permute.xlu0 %636
    %v638 = vsel %vm229, %v637, 0
    %640 = vmatprep.subr.mxu0 0.0
    %641 = vmatpush1.msra.mxu0 0.0
    %642 = vmatprep.subr.mxu0 0.0
    %643 = vmatpush1.msra.mxu0 0.0
    %644 = vmatprep.subr.mxu0 0.0
    %645 = vmatpush1.msra.mxu0 0.0
    %646 = vmatprep.subr.mxu0 0.0
    %647 = vmatpush1.msra.mxu0 0.0
    %648 = vmatprep.subr.mxu0 0.0
    %649 = vmatpush1.msra.mxu0 0.0
    %650 = vmatprep.subr.mxu0 0.0
    %651 = vmatpush1.msra.mxu0 0.0
    %652 = vmatprep.subr.mxu0 0.0
    %653 = vmatpush1.msra.mxu0 0.0
    %654 = vmatprep.subr.mxu0 0.0
    %655 = vmatpush1.msra.mxu0 0.0
    %656 = vmatprep.subr.mxu0 0.0
    %657 = vmatpush1.msra.mxu0 0.0
    %658 = vmatprep.subr.mxu0 0.0
    %659 = vmatpush1.msra.mxu0 0.0
    %660 = vmatprep.subr.mxu0 0.0
    %661 = vmatpush1.msra.mxu0 0.0
    %662 = vmatprep.subr.mxu0 0.0
    %663 = vmatpush1.msra.mxu0 0.0
    %664 = vmatprep.subr.mxu0 0.0
    %665 = vmatpush1.msra.mxu0 %v408
    %666 = vmatprep.subr.mxu0 0.0
    %667 = vmatpush1.msra.mxu0 %v407
    %668 = vmatprep.subr.mxu0 0.0
    %669 = vmatpush1.msra.mxu0 %v406
    %670 = vmatprep.subr.mxu0 0.0
    %671 = vmatpush1.msra.mxu0 %v405
    %672 = vmatprep.subr.mxu0 0.0
    %673 = vmatpush2.msra.mxu0 0.0
    %674 = vmatprep.subr.mxu0 0.0
    %675 = vmatpush2.msra.mxu0 0.0
    %676 = vmatprep.subr.mxu0 0.0
    %677 = vmatpush2.msra.mxu0 0.0
    %678 = vmatprep.subr.mxu0 0.0
    %679 = vmatpush2.msra.mxu0 0.0
    %680 = vmatprep.subr.mxu0 0.0
    %681 = vmatpush2.msra.mxu0 0.0
    %682 = vmatprep.subr.mxu0 0.0
    %683 = vmatpush2.msra.mxu0 0.0
    %684 = vmatprep.subr.mxu0 0.0
    %685 = vmatpush2.msra.mxu0 0.0
    %686 = vmatprep.subr.mxu0 0.0
    %687 = vmatpush2.msra.mxu0 0.0
    %688 = vmatprep.subr.mxu0 0.0
    %689 = vmatpush2.msra.mxu0 0.0
    %690 = vmatprep.subr.mxu0 0.0
    %691 = vmatpush2.msra.mxu0 0.0
    %692 = vmatprep.subr.mxu0 0.0
    %693 = vmatpush2.msra.mxu0 0.0
    %694 = vmatprep.subr.mxu0 0.0
    %695 = vmatpush2.msra.mxu0 0.0
    %696 = vmatprep.subr.mxu0 0.0
    %697 = vmatpush2.msra.mxu0 0.0
    %698 = vmatprep.subr.mxu0 0.0
    %699 = vmatpush2.msra.mxu0 0.0
    %700 = vmatprep.subr.mxu0 0.0
    %701 = vmatpush2.msra.mxu0 0.0
    %702 = vmatprep.subr.mxu0 0.0
    %703 = vmatpush2.msra.mxu0 0.0
    %704 = vmatprep.mubr.f32.mxu0 0.0
    %705 = vmatmul.mubr.f32.gmra.mxu0 %v638
    %v706 = vpop.f32.mrf.mxu0
    %v707 = vadd.f32 0.0, %v706
    %v708 = vpop.f32.mrf.mxu0
    %709 = vdwg.mxu0
    %v711 = vrot.slane %v707, 6
    %v713 = vadd.f32 %v397, %v711
    %v714 = vtanh.pop %v713
    %v715 = vxor.u32 %v713, 2147483648
    %v716 = vmul.f32 %v715, 1.442695
    %v717 = vpow.pop %v716
    %v718 = vadd.f32 %v717, 1.0
    %v719 = vrcp.pop %v718
    %v720 = vmul.f32 1.0, %v719
    %v721 = vsel %vm415, %v714, %v720
    %v723 = vrot.slane %v622, 7
    %v725 = vmul.f32 %v721, %v723
    %727 = vrot.lane.b32.xlu0 %v721, 64
    %v728 = vpop.permute.xlu0 %727
    %v730 = vmul.f32 %v721, %v728
    %732 = vrot.lane.b32.xlu0 %v730, 32
    %v733 = vpop.permute.xlu0 %732
    %v735 = vadd.f32 %v725, %v733
    %v736 = vtanh.pop %v735
    %738 = vrot.lane.b32.xlu0 %v736, 64
    %v739 = vpop.permute.xlu0 %738
    %v741 = vmul.f32 %v721, %v739
    %743 = vrot.lane.b32.xlu0 %v741, 32
    %v744 = vpop.permute.xlu0 %743
    %vm746 = vcmask 256002
    %747 = vst.msk [vmem:[#allocation2] sm:$0x4] %vm746, %v744
    %v748 = vrot.slane %v741, 2
    %749 = vrot.lane.b32.xlu0 %v748, 32
    %v750 = vpop.permute.xlu0 %749
    %v751 = vsel %vm229, %v750, 0
    %753 = vmatprep.subr.mxu0 0.0
    %754 = vmatpush1.msra.mxu0 0.0
    %755 = vmatprep.subr.mxu0 0.0
    %756 = vmatpush1.msra.mxu0 0.0
    %757 = vmatprep.subr.mxu0 0.0
    %758 = vmatpush1.msra.mxu0 0.0
    %759 = vmatprep.subr.mxu0 0.0
    %760 = vmatpush1.msra.mxu0 0.0
    %761 = vmatprep.subr.mxu0 0.0
    %762 = vmatpush1.msra.mxu0 0.0
    %763 = vmatprep.subr.mxu0 0.0
    %764 = vmatpush1.msra.mxu0 0.0
    %765 = vmatprep.subr.mxu0 0.0
    %766 = vmatpush1.msra.mxu0 0.0
    %767 = vmatprep.subr.mxu0 0.0
    %768 = vmatpush1.msra.mxu0 0.0
    %769 = vmatprep.subr.mxu0 0.0
    %770 = vmatpush1.msra.mxu0 0.0
    %771 = vmatprep.subr.mxu0 0.0
    %772 = vmatpush1.msra.mxu0 0.0
    %773 = vmatprep.subr.mxu0 0.0
    %774 = vmatpush1.msra.mxu0 0.0
    %775 = vmatprep.subr.mxu0 0.0
    %776 = vmatpush1.msra.mxu0 0.0
    %777 = vmatprep.subr.mxu0 0.0
    %778 = vmatpush1.msra.mxu0 %v408
    %779 = vmatprep.subr.mxu0 0.0
    %780 = vmatpush1.msra.mxu0 %v407
    %781 = vmatprep.subr.mxu0 0.0
    %782 = vmatpush1.msra.mxu0 %v406
    %783 = vmatprep.subr.mxu0 0.0
    %784 = vmatpush1.msra.mxu0 %v405
    %785 = vmatprep.subr.mxu0 0.0
    %786 = vmatpush2.msra.mxu0 0.0
    %787 = vmatprep.subr.mxu0 0.0
    %788 = vmatpush2.msra.mxu0 0.0
    %789 = vmatprep.subr.mxu0 0.0
    %790 = vmatpush2.msra.mxu0 0.0
    %791 = vmatprep.subr.mxu0 0.0
    %792 = vmatpush2.msra.mxu0 0.0
    %793 = vmatprep.subr.mxu0 0.0
    %794 = vmatpush2.msra.mxu0 0.0
    %795 = vmatprep.subr.mxu0 0.0
    %796 = vmatpush2.msra.mxu0 0.0
    %797 = vmatprep.subr.mxu0 0.0
    %798 = vmatpush2.msra.mxu0 0.0
    %799 = vmatprep.subr.mxu0 0.0
    %800 = vmatpush2.msra.mxu0 0.0
    %801 = vmatprep.subr.mxu0 0.0
    %802 = vmatpush2.msra.mxu0 0.0
    %803 = vmatprep.subr.mxu0 0.0
    %804 = vmatpush2.msra.mxu0 0.0
    %805 = vmatprep.subr.mxu0 0.0
    %806 = vmatpush2.msra.mxu0 0.0
    %807 = vmatprep.subr.mxu0 0.0
    %808 = vmatpush2.msra.mxu0 0.0
    %809 = vmatprep.subr.mxu0 0.0
    %810 = vmatpush2.msra.mxu0 0.0
    %811 = vmatprep.subr.mxu0 0.0
    %812 = vmatpush2.msra.mxu0 0.0
    %813 = vmatprep.subr.mxu0 0.0
    %814 = vmatpush2.msra.mxu0 0.0
    %815 = vmatprep.subr.mxu0 0.0
    %816 = vmatpush2.msra.mxu0 0.0
    %817 = vmatprep.mubr.f32.mxu0 0.0
    %818 = vmatmul.mubr.f32.gmra.mxu0 %v751
    %v819 = vpop.f32.mrf.mxu0
    %v820 = vadd.f32 0.0, %v819
    %v821 = vpop.f32.mrf.mxu0
    %822 = vdwg.mxu0
    %v824 = vrot.slane %v820, 5
    %v826 = vadd.f32 %v397, %v824
    %v827 = vtanh.pop %v826
    %v828 = vxor.u32 %v826, 2147483648
    %v829 = vmul.f32 %v828, 1.442695
    %v830 = vpow.pop %v829
    %v831 = vadd.f32 %v830, 1.0
    %v832 = vrcp.pop %v831
    %v833 = vmul.f32 1.0, %v832
    %v834 = vsel %vm415, %v827, %v833
    %v836 = vrot.slane %v735, 7
    %v838 = vmul.f32 %v834, %v836
    %840 = vrot.lane.b32.xlu0 %v834, 64
    %v841 = vpop.permute.xlu0 %840
    %v843 = vmul.f32 %v834, %v841
    %845 = vrot.lane.b32.xlu0 %v843, 32
    %v846 = vpop.permute.xlu0 %845
    %v848 = vadd.f32 %v838, %v846
    %v849 = vtanh.pop %v848
    %851 = vrot.lane.b32.xlu0 %v849, 64
    %v852 = vpop.permute.xlu0 %851
    %v854 = vmul.f32 %v834, %v852
    %856 = vrot.lane.b32.xlu0 %v854, 32
    %v857 = vpop.permute.xlu0 %856
    %vm859 = vcmask 257027
    %860 = vst.msk [vmem:[#allocation2] sm:$0x8] %vm859, %v857
    %v861 = vrot.slane %v854, 3
    %862 = vrot.lane.b32.xlu0 %v861, 32
    %v863 = vpop.permute.xlu0 %862
    %v864 = vsel %vm229, %v863, 0
    %866 = vmatprep.subr.mxu0 0.0
    %867 = vmatpush1.msra.mxu0 0.0
    %868 = vmatprep.subr.mxu0 0.0
    %869 = vmatpush1.msra.mxu0 0.0
    %870 = vmatprep.subr.mxu0 0.0
    %871 = vmatpush1.msra.mxu0 0.0
    %872 = vmatprep.subr.mxu0 0.0
    %873 = vmatpush1.msra.mxu0 0.0
    %874 = vmatprep.subr.mxu0 0.0
    %875 = vmatpush1.msra.mxu0 0.0
    %876 = vmatprep.subr.mxu0 0.0
    %877 = vmatpush1.msra.mxu0 0.0
    %878 = vmatprep.subr.mxu0 0.0
    %879 = vmatpush1.msra.mxu0 0.0
    %880 = vmatprep.subr.mxu0 0.0
    %881 = vmatpush1.msra.mxu0 0.0
    %882 = vmatprep.subr.mxu0 0.0
    %883 = vmatpush1.msra.mxu0 0.0
    %884 = vmatprep.subr.mxu0 0.0
    %885 = vmatpush1.msra.mxu0 0.0
    %886 = vmatprep.subr.mxu0 0.0
    %887 = vmatpush1.msra.mxu0 0.0
    %888 = vmatprep.subr.mxu0 0.0
    %889 = vmatpush1.msra.mxu0 0.0
    %890 = vmatprep.subr.mxu0 0.0
    %891 = vmatpush1.msra.mxu0 %v408
    %892 = vmatprep.subr.mxu0 0.0
    %893 = vmatpush1.msra.mxu0 %v407
    %894 = vmatprep.subr.mxu0 0.0
    %895 = vmatpush1.msra.mxu0 %v406
    %896 = vmatprep.subr.mxu0 0.0
    %897 = vmatpush1.msra.mxu0 %v405
    %898 = vmatprep.subr.mxu0 0.0
    %899 = vmatpush2.msra.mxu0 0.0
    %900 = vmatprep.subr.mxu0 0.0
    %901 = vmatpush2.msra.mxu0 0.0
    %902 = vmatprep.subr.mxu0 0.0
    %903 = vmatpush2.msra.mxu0 0.0
    %904 = vmatprep.subr.mxu0 0.0
    %905 = vmatpush2.msra.mxu0 0.0
    %906 = vmatprep.subr.mxu0 0.0
    %907 = vmatpush2.msra.mxu0 0.0
    %908 = vmatprep.subr.mxu0 0.0
    %909 = vmatpush2.msra.mxu0 0.0
    %910 = vmatprep.subr.mxu0 0.0
    %911 = vmatpush2.msra.mxu0 0.0
    %912 = vmatprep.subr.mxu0 0.0
    %913 = vmatpush2.msra.mxu0 0.0
    %914 = vmatprep.subr.mxu0 0.0
    %915 = vmatpush2.msra.mxu0 0.0
    %916 = vmatprep.subr.mxu0 0.0
    %917 = vmatpush2.msra.mxu0 0.0
    %918 = vmatprep.subr.mxu0 0.0
    %919 = vmatpush2.msra.mxu0 0.0
    %920 = vmatprep.subr.mxu0 0.0
    %921 = vmatpush2.msra.mxu0 0.0
    %922 = vmatprep.subr.mxu0 0.0
    %923 = vmatpush2.msra.mxu0 0.0
    %924 = vmatprep.subr.mxu0 0.0
    %925 = vmatpush2.msra.mxu0 0.0
    %926 = vmatprep.subr.mxu0 0.0
    %927 = vmatpush2.msra.mxu0 0.0
    %928 = vmatprep.subr.mxu0 0.0
    %929 = vmatpush2.msra.mxu0 0.0
    %930 = vmatprep.mubr.f32.mxu0 0.0
    %931 = vmatmul.mubr.f32.gmra.mxu0 %v864
    %v932 = vpop.f32.mrf.mxu0
    %v933 = vadd.f32 0.0, %v932
    %v934 = vpop.f32.mrf.mxu0
    %935 = vdwg.mxu0
    %v937 = vrot.slane %v933, 4
    %v939 = vadd.f32 %v397, %v937
    %v940 = vtanh.pop %v939
    %v941 = vxor.u32 %v939, 2147483648
    %v942 = vmul.f32 %v941, 1.442695
    %v943 = vpow.pop %v942
    %v944 = vadd.f32 %v943, 1.0
    %v945 = vrcp.pop %v944
    %v946 = vmul.f32 1.0, %v945
    %v947 = vsel %vm415, %v940, %v946
    %v949 = vrot.slane %v848, 7
    %v951 = vmul.f32 %v947, %v949
    %953 = vrot.lane.b32.xlu0 %v947, 64
    %v954 = vpop.permute.xlu0 %953
    %v956 = vmul.f32 %v947, %v954
    %958 = vrot.lane.b32.xlu0 %v956, 32
    %v959 = vpop.permute.xlu0 %958
    %v961 = vadd.f32 %v951, %v959
    %v962 = vtanh.pop %v961
    %964 = vrot.lane.b32.xlu0 %v962, 64
    %v965 = vpop.permute.xlu0 %964
    %v967 = vmul.f32 %v947, %v965
    %969 = vrot.lane.b32.xlu0 %v967, 32
    %v970 = vpop.permute.xlu0 %969
    %vm972 = vcmask 258052
    %973 = vst.msk [vmem:[#allocation2] sm:$0x10] %vm972, %v970
    %v974 = vrot.slane %v967, 4
    %975 = vrot.lane.b32.xlu0 %v974, 32
    %v976 = vpop.permute.xlu0 %975
    %v977 = vsel %vm229, %v976, 0
    %979 = vmatprep.subr.mxu0 0.0
    %980 = vmatpush1.msra.mxu0 0.0
    %981 = vmatprep.subr.mxu0 0.0
    %982 = vmatpush1.msra.mxu0 0.0
    %983 = vmatprep.subr.mxu0 0.0
    %984 = vmatpush1.msra.mxu0 0.0
    %985 = vmatprep.subr.mxu0 0.0
    %986 = vmatpush1.msra.mxu0 0.0
    %987 = vmatprep.subr.mxu0 0.0
    %988 = vmatpush1.msra.mxu0 0.0
    %989 = vmatprep.subr.mxu0 0.0
    %990 = vmatpush1.msra.mxu0 0.0
    %991 = vmatprep.subr.mxu0 0.0
    %992 = vmatpush1.msra.mxu0 0.0
    %993 = vmatprep.subr.mxu0 0.0
    %994 = vmatpush1.msra.mxu0 0.0
    %995 = vmatprep.subr.mxu0 0.0
    %996 = vmatpush1.msra.mxu0 0.0
    %997 = vmatprep.subr.mxu0 0.0
    %998 = vmatpush1.msra.mxu0 0.0
    %999 = vmatprep.subr.mxu0 0.0
    %1000 = vmatpush1.msra.mxu0 0.0
    %1001 = vmatprep.subr.mxu0 0.0
    %1002 = vmatpush1.msra.mxu0 0.0
    %1003 = vmatprep.subr.mxu0 0.0
    %1004 = vmatpush1.msra.mxu0 %v408
    %1005 = vmatprep.subr.mxu0 0.0
    %1006 = vmatpush1.msra.mxu0 %v407
    %1007 = vmatprep.subr.mxu0 0.0
    %1008 = vmatpush1.msra.mxu0 %v406
    %1009 = vmatprep.subr.mxu0 0.0
    %1010 = vmatpush1.msra.mxu0 %v405
    %1011 = vmatprep.subr.mxu0 0.0
    %1012 = vmatpush2.msra.mxu0 0.0
    %1013 = vmatprep.subr.mxu0 0.0
    %1014 = vmatpush2.msra.mxu0 0.0
    %1015 = vmatprep.subr.mxu0 0.0
    %1016 = vmatpush2.msra.mxu0 0.0
    %1017 = vmatprep.subr.mxu0 0.0
    %1018 = vmatpush2.msra.mxu0 0.0
    %1019 = vmatprep.subr.mxu0 0.0
    %1020 = vmatpush2.msra.mxu0 0.0
    %1021 = vmatprep.subr.mxu0 0.0
    %1022 = vmatpush2.msra.mxu0 0.0
    %1023 = vmatprep.subr.mxu0 0.0
    %1024 = vmatpush2.msra.mxu0 0.0
    %1025 = vmatprep.subr.mxu0 0.0
    %1026 = vmatpush2.msra.mxu0 0.0
    %1027 = vmatprep.subr.mxu0 0.0
    %1028 = vmatpush2.msra.mxu0 0.0
    %1029 = vmatprep.subr.mxu0 0.0
    %1030 = vmatpush2.msra.mxu0 0.0
    %1031 = vmatprep.subr.mxu0 0.0
    %1032 = vmatpush2.msra.mxu0 0.0
    %1033 = vmatprep.subr.mxu0 0.0
    %1034 = vmatpush2.msra.mxu0 0.0
    %1035 = vmatprep.subr.mxu0 0.0
    %1036 = vmatpush2.msra.mxu0 0.0
    %1037 = vmatprep.subr.mxu0 0.0
    %1038 = vmatpush2.msra.mxu0 0.0
    %1039 = vmatprep.subr.mxu0 0.0
    %1040 = vmatpush2.msra.mxu0 0.0
    %1041 = vmatprep.subr.mxu0 0.0
    %1042 = vmatpush2.msra.mxu0 0.0
    %1043 = vmatprep.mubr.f32.mxu0 0.0
    %1044 = vmatmul.mubr.f32.gmra.mxu0 %v977
    %v1045 = vpop.f32.mrf.mxu0
    %v1046 = vadd.f32 0.0, %v1045
    %v1047 = vpop.f32.mrf.mxu0
    %1048 = vdwg.mxu0
    %v1050 = vrot.slane %v1046, 3
    %v1052 = vadd.f32 %v397, %v1050
    %v1053 = vtanh.pop %v1052
    %v1054 = vxor.u32 %v1052, 2147483648
    %v1055 = vmul.f32 %v1054, 1.442695
    %v1056 = vpow.pop %v1055
    %v1057 = vadd.f32 %v1056, 1.0
    %v1058 = vrcp.pop %v1057
    %v1059 = vmul.f32 1.0, %v1058
    %v1060 = vsel %vm415, %v1053, %v1059
    %v1062 = vrot.slane %v961, 7
    %v1064 = vmul.f32 %v1060, %v1062
    %1066 = vrot.lane.b32.xlu0 %v1060, 64
    %v1067 = vpop.permute.xlu0 %1066
    %v1069 = vmul.f32 %v1060, %v1067
    %1071 = vrot.lane.b32.xlu0 %v1069, 32
    %v1072 = vpop.permute.xlu0 %1071
    %v1074 = vadd.f32 %v1064, %v1072
    %v1075 = vtanh.pop %v1074
    %1077 = vrot.lane.b32.xlu0 %v1075, 64
    %v1078 = vpop.permute.xlu0 %1077
    %v1080 = vmul.f32 %v1060, %v1078
    %1082 = vrot.lane.b32.xlu0 %v1080, 32
    %v1083 = vpop.permute.xlu0 %1082
    %vm1085 = vcmask 259077
    %1086 = vst.msk [vmem:[#allocation2] sm:$0x20] %vm1085, %v1083
    %v1087 = vrot.slane %v1080, 5
    %1088 = vrot.lane.b32.xlu0 %v1087, 32
    %v1089 = vpop.permute.xlu0 %1088
    %v1090 = vsel %vm229, %v1089, 0
    %1092 = vmatprep.subr.mxu0 0.0
    %1093 = vmatpush1.msra.mxu0 0.0
    %1094 = vmatprep.subr.mxu0 0.0
    %1095 = vmatpush1.msra.mxu0 0.0
    %1096 = vmatprep.subr.mxu0 0.0
    %1097 = vmatpush1.msra.mxu0 0.0
    %1098 = vmatprep.subr.mxu0 0.0
    %1099 = vmatpush1.msra.mxu0 0.0
    %1100 = vmatprep.subr.mxu0 0.0
    %1101 = vmatpush1.msra.mxu0 0.0
    %1102 = vmatprep.subr.mxu0 0.0
    %1103 = vmatpush1.msra.mxu0 0.0
    %1104 = vmatprep.subr.mxu0 0.0
    %1105 = vmatpush1.msra.mxu0 0.0
    %1106 = vmatprep.subr.mxu0 0.0
    %1107 = vmatpush1.msra.mxu0 0.0
    %1108 = vmatprep.subr.mxu0 0.0
    %1109 = vmatpush1.msra.mxu0 0.0
    %1110 = vmatprep.subr.mxu0 0.0
    %1111 = vmatpush1.msra.mxu0 0.0
    %1112 = vmatprep.subr.mxu0 0.0
    %1113 = vmatpush1.msra.mxu0 0.0
    %1114 = vmatprep.subr.mxu0 0.0
    %1115 = vmatpush1.msra.mxu0 0.0
    %1116 = vmatprep.subr.mxu0 0.0
    %1117 = vmatpush1.msra.mxu0 %v408
    %1118 = vmatprep.subr.mxu0 0.0
    %1119 = vmatpush1.msra.mxu0 %v407
    %1120 = vmatprep.subr.mxu0 0.0
    %1121 = vmatpush1.msra.mxu0 %v406
    %1122 = vmatprep.subr.mxu0 0.0
    %1123 = vmatpush1.msra.mxu0 %v405
    %1124 = vmatprep.subr.mxu0 0.0
    %1125 = vmatpush2.msra.mxu0 0.0
    %1126 = vmatprep.subr.mxu0 0.0
    %1127 = vmatpush2.msra.mxu0 0.0
    %1128 = vmatprep.subr.mxu0 0.0
    %1129 = vmatpush2.msra.mxu0 0.0
    %1130 = vmatprep.subr.mxu0 0.0
    %1131 = vmatpush2.msra.mxu0 0.0
    %1132 = vmatprep.subr.mxu0 0.0
    %1133 = vmatpush2.msra.mxu0 0.0
    %1134 = vmatprep.subr.mxu0 0.0
    %1135 = vmatpush2.msra.mxu0 0.0
    %1136 = vmatprep.subr.mxu0 0.0
    %1137 = vmatpush2.msra.mxu0 0.0
    %1138 = vmatprep.subr.mxu0 0.0
    %1139 = vmatpush2.msra.mxu0 0.0
    %1140 = vmatprep.subr.mxu0 0.0
    %1141 = vmatpush2.msra.mxu0 0.0
    %1142 = vmatprep.subr.mxu0 0.0
    %1143 = vmatpush2.msra.mxu0 0.0
    %1144 = vmatprep.subr.mxu0 0.0
    %1145 = vmatpush2.msra.mxu0 0.0
    %1146 = vmatprep.subr.mxu0 0.0
    %1147 = vmatpush2.msra.mxu0 0.0
    %1148 = vmatprep.subr.mxu0 0.0
    %1149 = vmatpush2.msra.mxu0 0.0
    %1150 = vmatprep.subr.mxu0 0.0
    %1151 = vmatpush2.msra.mxu0 0.0
    %1152 = vmatprep.subr.mxu0 0.0
    %1153 = vmatpush2.msra.mxu0 0.0
    %1154 = vmatprep.subr.mxu0 0.0
    %1155 = vmatpush2.msra.mxu0 0.0
    %1156 = vmatprep.mubr.f32.mxu0 0.0
    %1157 = vmatmul.mubr.f32.gmra.mxu0 %v1090
    %v1158 = vpop.f32.mrf.mxu0
    %v1159 = vadd.f32 0.0, %v1158
    %v1160 = vpop.f32.mrf.mxu0
    %1161 = vdwg.mxu0
    %v1163 = vrot.slane %v1159, 2
    %v1165 = vadd.f32 %v397, %v1163
    %v1166 = vtanh.pop %v1165
    %v1167 = vxor.u32 %v1165, 2147483648
    %v1168 = vmul.f32 %v1167, 1.442695
    %v1169 = vpow.pop %v1168
    %v1170 = vadd.f32 %v1169, 1.0
    %v1171 = vrcp.pop %v1170
    %v1172 = vmul.f32 1.0, %v1171
    %v1173 = vsel %vm415, %v1166, %v1172
    %v1175 = vrot.slane %v1074, 7
    %v1177 = vmul.f32 %v1173, %v1175
    %1179 = vrot.lane.b32.xlu0 %v1173, 64
    %v1180 = vpop.permute.xlu0 %1179
    %v1182 = vmul.f32 %v1173, %v1180
    %1184 = vrot.lane.b32.xlu0 %v1182, 32
    %v1185 = vpop.permute.xlu0 %1184
    %v1187 = vadd.f32 %v1177, %v1185
    %v1188 = vtanh.pop %v1187
    %1190 = vrot.lane.b32.xlu0 %v1188, 64
    %v1191 = vpop.permute.xlu0 %1190
    %v1193 = vmul.f32 %v1173, %v1191
    %1195 = vrot.lane.b32.xlu0 %v1193, 32
    %v1196 = vpop.permute.xlu0 %1195
    %vm1198 = vcmask 260102
    %1199 = vst.msk [vmem:[#allocation2] sm:$0x40] %vm1198, %v1196
    %v1200 = vrot.slane %v1193, 6
    %1201 = vrot.lane.b32.xlu0 %v1200, 32
    %v1202 = vpop.permute.xlu0 %1201
    %v1203 = vsel %vm229, %v1202, 0
    %1205 = vmatprep.subr.mxu0 0.0
    %1206 = vmatpush1.msra.mxu0 0.0
    %1207 = vmatprep.subr.mxu0 0.0
    %1208 = vmatpush1.msra.mxu0 0.0
    %1209 = vmatprep.subr.mxu0 0.0
    %1210 = vmatpush1.msra.mxu0 0.0
    %1211 = vmatprep.subr.mxu0 0.0
    %1212 = vmatpush1.msra.mxu0 0.0
    %1213 = vmatprep.subr.mxu0 0.0
    %1214 = vmatpush1.msra.mxu0 0.0
    %1215 = vmatprep.subr.mxu0 0.0
    %1216 = vmatpush1.msra.mxu0 0.0
    %1217 = vmatprep.subr.mxu0 0.0
    %1218 = vmatpush1.msra.mxu0 0.0
    %1219 = vmatprep.subr.mxu0 0.0
    %1220 = vmatpush1.msra.mxu0 0.0
    %1221 = vmatprep.subr.mxu0 0.0
    %1222 = vmatpush1.msra.mxu0 0.0
    %1223 = vmatprep.subr.mxu0 0.0
    %1224 = vmatpush1.msra.mxu0 0.0
    %1225 = vmatprep.subr.mxu0 0.0
    %1226 = vmatpush1.msra.mxu0 0.0
    %1227 = vmatprep.subr.mxu0 0.0
    %1228 = vmatpush1.msra.mxu0 0.0
    %1229 = vmatprep.subr.mxu0 0.0
    %1230 = vmatpush1.msra.mxu0 %v408
    %1231 = vmatprep.subr.mxu0 0.0
    %1232 = vmatpush1.msra.mxu0 %v407
    %1233 = vmatprep.subr.mxu0 0.0
    %1234 = vmatpush1.msra.mxu0 %v406
    %1235 = vmatprep.subr.mxu0 0.0
    %1236 = vmatpush1.msra.mxu0 %v405
    %1237 = vmatprep.subr.mxu0 0.0
    %1238 = vmatpush2.msra.mxu0 0.0
    %1239 = vmatprep.subr.mxu0 0.0
    %1240 = vmatpush2.msra.mxu0 0.0
    %1241 = vmatprep.subr.mxu0 0.0
    %1242 = vmatpush2.msra.mxu0 0.0
    %1243 = vmatprep.subr.mxu0 0.0
    %1244 = vmatpush2.msra.mxu0 0.0
    %1245 = vmatprep.subr.mxu0 0.0
    %1246 = vmatpush2.msra.mxu0 0.0
    %1247 = vmatprep.subr.mxu0 0.0
    %1248 = vmatpush2.msra.mxu0 0.0
    %1249 = vmatprep.subr.mxu0 0.0
    %1250 = vmatpush2.msra.mxu0 0.0
    %1251 = vmatprep.subr.mxu0 0.0
    %1252 = vmatpush2.msra.mxu0 0.0
    %1253 = vmatprep.subr.mxu0 0.0
    %1254 = vmatpush2.msra.mxu0 0.0
    %1255 = vmatprep.subr.mxu0 0.0
    %1256 = vmatpush2.msra.mxu0 0.0
    %1257 = vmatprep.subr.mxu0 0.0
    %1258 = vmatpush2.msra.mxu0 0.0
    %1259 = vmatprep.subr.mxu0 0.0
    %1260 = vmatpush2.msra.mxu0 0.0
    %1261 = vmatprep.subr.mxu0 0.0
    %1262 = vmatpush2.msra.mxu0 0.0
    %1263 = vmatprep.subr.mxu0 0.0
    %1264 = vmatpush2.msra.mxu0 0.0
    %1265 = vmatprep.subr.mxu0 0.0
    %1266 = vmatpush2.msra.mxu0 0.0
    %1267 = vmatprep.subr.mxu0 0.0
    %1268 = vmatpush2.msra.mxu0 0.0
    %1269 = vmatprep.mubr.f32.mxu0 0.0
    %1270 = vmatmul.mubr.f32.gmra.mxu0 %v1203
    %v1271 = vpop.f32.mrf.mxu0
    %v1272 = vadd.f32 0.0, %v1271
    %v1273 = vpop.f32.mrf.mxu0
    %1274 = vdwg.mxu0
    %v1276 = vrot.slane %v1272, 1
    %v1278 = vadd.f32 %v397, %v1276
    %v1279 = vtanh.pop %v1278
    %v1280 = vxor.u32 %v1278, 2147483648
    %v1281 = vmul.f32 %v1280, 1.442695
    %v1282 = vpow.pop %v1281
    %v1283 = vadd.f32 %v1282, 1.0
    %v1284 = vrcp.pop %v1283
    %v1285 = vmul.f32 1.0, %v1284
    %v1286 = vsel %vm415, %v1279, %v1285
    %v1288 = vrot.slane %v1187, 7
    %v1290 = vmul.f32 %v1286, %v1288
    %1292 = vrot.lane.b32.xlu0 %v1286, 64
    %v1293 = vpop.permute.xlu0 %1292
    %v1295 = vmul.f32 %v1286, %v1293
    %1297 = vrot.lane.b32.xlu0 %v1295, 32
    %v1298 = vpop.permute.xlu0 %1297
    %v1300 = vadd.f32 %v1290, %v1298
    %v1301 = vtanh.pop %v1300
    %1303 = vrot.lane.b32.xlu0 %v1301, 64
    %v1304 = vpop.permute.xlu0 %1303
    %v1306 = vmul.f32 %v1286, %v1304
    %1308 = vrot.lane.b32.xlu0 %v1306, 32
    %v1309 = vpop.permute.xlu0 %1308
    %vm1311 = vcmask 261127
    %1312 = vst.msk [vmem:[#allocation2] sm:$0x80] %vm1311, %v1309
    %1313 = vst.msk [vmem:[#allocation14 - $0x7] sm:$0x80] %vm1311, %v1309
    %1315 = vrot.lane.b32.xlu0 %v1300, 96
    %v1316 = vpop.permute.xlu0 %1315
    %1318 = vst.msk [vmem:[#allocation15 - $0x7] sm:$0x80] %vm1311, %v1316
    %v1319 = vrot.slane %v409, 1
    %v1320 = vsel %vm229, %v1319, 0
    %1322 = vmatprep.subr.mxu0 0.0
    %1323 = vmatpush1.msra.mxu0 0.0
    %1324 = vmatprep.subr.mxu0 0.0
    %1325 = vmatpush1.msra.mxu0 0.0
    %1326 = vmatprep.subr.mxu0 0.0
    %1327 = vmatpush1.msra.mxu0 0.0
    %1328 = vmatprep.subr.mxu0 0.0
    %1329 = vmatpush1.msra.mxu0 0.0
    %1330 = vmatprep.subr.mxu0 0.0
    %1331 = vmatpush1.msra.mxu0 0.0
    %1332 = vmatprep.subr.mxu0 0.0
    %1333 = vmatpush1.msra.mxu0 0.0
    %1334 = vmatprep.subr.mxu0 0.0
    %1335 = vmatpush1.msra.mxu0 0.0
    %1336 = vmatprep.subr.mxu0 0.0
    %1337 = vmatpush1.msra.mxu0 0.0
    %1338 = vmatprep.subr.mxu0 0.0
    %1339 = vmatpush1.msra.mxu0 0.0
    %1340 = vmatprep.subr.mxu0 0.0
    %1341 = vmatpush1.msra.mxu0 0.0
    %1342 = vmatprep.subr.mxu0 0.0
    %1343 = vmatpush1.msra.mxu0 0.0
    %1344 = vmatprep.subr.mxu0 0.0
    %1345 = vmatpush1.msra.mxu0 0.0
    %1346 = vmatprep.subr.mxu0 0.0
    %1347 = vmatpush1.msra.mxu0 %v408
    %1348 = vmatprep.subr.mxu0 0.0
    %1349 = vmatpush1.msra.mxu0 %v407
    %1350 = vmatprep.subr.mxu0 0.0
    %1351 = vmatpush1.msra.mxu0 %v406
    %1352 = vmatprep.subr.mxu0 0.0
    %1353 = vmatpush1.msra.mxu0 %v405
    %1354 = vmatprep.subr.mxu0 0.0
    %1355 = vmatpush2.msra.mxu0 0.0
    %1356 = vmatprep.subr.mxu0 0.0
    %1357 = vmatpush2.msra.mxu0 0.0
    %1358 = vmatprep.subr.mxu0 0.0
    %1359 = vmatpush2.msra.mxu0 0.0
    %1360 = vmatprep.subr.mxu0 0.0
    %1361 = vmatpush2.msra.mxu0 0.0
    %1362 = vmatprep.subr.mxu0 0.0
    %1363 = vmatpush2.msra.mxu0 0.0
    %1364 = vmatprep.subr.mxu0 0.0
    %1365 = vmatpush2.msra.mxu0 0.0
    %1366 = vmatprep.subr.mxu0 0.0
    %1367 = vmatpush2.msra.mxu0 0.0
    %1368 = vmatprep.subr.mxu0 0.0
    %1369 = vmatpush2.msra.mxu0 0.0
    %1370 = vmatprep.subr.mxu0 0.0
    %1371 = vmatpush2.msra.mxu0 0.0
    %1372 = vmatprep.subr.mxu0 0.0
    %1373 = vmatpush2.msra.mxu0 0.0
    %1374 = vmatprep.subr.mxu0 0.0
    %1375 = vmatpush2.msra.mxu0 0.0
    %1376 = vmatprep.subr.mxu0 0.0
    %1377 = vmatpush2.msra.mxu0 0.0
    %1378 = vmatprep.subr.mxu0 0.0
    %1379 = vmatpush2.msra.mxu0 0.0
    %1380 = vmatprep.subr.mxu0 0.0
    %1381 = vmatpush2.msra.mxu0 0.0
    %1382 = vmatprep.subr.mxu0 0.0
    %1383 = vmatpush2.msra.mxu0 0.0
    %1384 = vmatprep.subr.mxu0 0.0
    %1385 = vmatpush2.msra.mxu0 0.0
    %1386 = vmatprep.mubr.f32.mxu0 0.0
    %1387 = vmatmul.mubr.f32.gmra.mxu0 %v1320
    %v1388 = vpop.f32.mrf.mxu0
    %v1389 = vadd.f32 0.0, %v1388
    %v1390 = vpop.f32.mrf.mxu0
    %1391 = vdwg.mxu0
    %v1392 = vadd.f32 %v402, %v1389
    %v1393 = vtanh.pop %v1392
    %v1394 = vxor.u32 %v1392, 2147483648
    %v1395 = vmul.f32 %v1394, 1.442695
    %v1396 = vpow.pop %v1395
    %v1397 = vadd.f32 %v1396, 1.0
    %v1398 = vrcp.pop %v1397
    %v1399 = vmul.f32 1.0, %v1398
    %v1400 = vsel %vm415, %v1393, %v1399
    %v1401 = vrot.slane %v410, 1
    %1402 = vrot.lane.b32.xlu0 %v1401, 32
    %v1403 = vpop.permute.xlu0 %1402
    %v1405 = vmul.f32 %v1400, %v1403
    %1407 = vrot.lane.b32.xlu0 %v1400, 64
    %v1408 = vpop.permute.xlu0 %1407
    %v1410 = vmul.f32 %v1400, %v1408
    %1412 = vrot.lane.b32.xlu0 %v1410, 32
    %v1413 = vpop.permute.xlu0 %1412
    %v1415 = vadd.f32 %v1405, %v1413
    %v1416 = vtanh.pop %v1415
    %1418 = vrot.lane.b32.xlu0 %v1416, 64
    %v1419 = vpop.permute.xlu0 %1418
    %v1421 = vmul.f32 %v1400, %v1419
    %1423 = vrot.lane.b32.xlu0 %v1421, 32
    %v1424 = vpop.permute.xlu0 %1423
    %1426 = vst.msk [vmem:[#allocation2 + $0x8] sm:$0x1] %vm523, %v1424
    %v1427 = vsel %vm229, %v1424, 0
    %1429 = vmatprep.subr.mxu0 0.0
    %1430 = vmatpush1.msra.mxu0 0.0
    %1431 = vmatprep.subr.mxu0 0.0
    %1432 = vmatpush1.msra.mxu0 0.0
    %1433 = vmatprep.subr.mxu0 0.0
    %1434 = vmatpush1.msra.mxu0 0.0
    %1435 = vmatprep.subr.mxu0 0.0
    %1436 = vmatpush1.msra.mxu0 0.0
    %1437 = vmatprep.subr.mxu0 0.0
    %1438 = vmatpush1.msra.mxu0 0.0
    %1439 = vmatprep.subr.mxu0 0.0
    %1440 = vmatpush1.msra.mxu0 0.0
    %1441 = vmatprep.subr.mxu0 0.0
    %1442 = vmatpush1.msra.mxu0 0.0
    %1443 = vmatprep.subr.mxu0 0.0
    %1444 = vmatpush1.msra.mxu0 0.0
    %1445 = vmatprep.subr.mxu0 0.0
    %1446 = vmatpush1.msra.mxu0 0.0
    %1447 = vmatprep.subr.mxu0 0.0
    %1448 = vmatpush1.msra.mxu0 0.0
    %1449 = vmatprep.subr.mxu0 0.0
    %1450 = vmatpush1.msra.mxu0 0.0
    %1451 = vmatprep.subr.mxu0 0.0
    %1452 = vmatpush1.msra.mxu0 0.0
    %1453 = vmatprep.subr.mxu0 0.0
    %1454 = vmatpush1.msra.mxu0 %v408
    %1455 = vmatprep.subr.mxu0 0.0
    %1456 = vmatpush1.msra.mxu0 %v407
    %1457 = vmatprep.subr.mxu0 0.0
    %1458 = vmatpush1.msra.mxu0 %v406
    %1459 = vmatprep.subr.mxu0 0.0
    %1460 = vmatpush1.msra.mxu0 %v405
    %1461 = vmatprep.subr.mxu0 0.0
    %1462 = vmatpush2.msra.mxu0 0.0
    %1463 = vmatprep.subr.mxu0 0.0
    %1464 = vmatpush2.msra.mxu0 0.0
    %1465 = vmatprep.subr.mxu0 0.0
    %1466 = vmatpush2.msra.mxu0 0.0
    %1467 = vmatprep.subr.mxu0 0.0
    %1468 = vmatpush2.msra.mxu0 0.0
    %1469 = vmatprep.subr.mxu0 0.0
    %1470 = vmatpush2.msra.mxu0 0.0
    %1471 = vmatprep.subr.mxu0 0.0
    %1472 = vmatpush2.msra.mxu0 0.0
    %1473 = vmatprep.subr.mxu0 0.0
    %1474 = vmatpush2.msra.mxu0 0.0
    %1475 = vmatprep.subr.mxu0 0.0
    %1476 = vmatpush2.msra.mxu0 0.0
    %1477 = vmatprep.subr.mxu0 0.0
    %1478 = vmatpush2.msra.mxu0 0.0
    %1479 = vmatprep.subr.mxu0 0.0
    %1480 = vmatpush2.msra.mxu0 0.0
    %1481 = vmatprep.subr.mxu0 0.0
    %1482 = vmatpush2.msra.mxu0 0.0
    %1483 = vmatprep.subr.mxu0 0.0
    %1484 = vmatpush2.msra.mxu0 0.0
    %1485 = vmatprep.subr.mxu0 0.0
    %1486 = vmatpush2.msra.mxu0 0.0
    %1487 = vmatprep.subr.mxu0 0.0
    %1488 = vmatpush2.msra.mxu0 0.0
    %1489 = vmatprep.subr.mxu0 0.0
    %1490 = vmatpush2.msra.mxu0 0.0
    %1491 = vmatprep.subr.mxu0 0.0
    %1492 = vmatpush2.msra.mxu0 0.0
    %1493 = vmatprep.mubr.f32.mxu0 0.0
    %1494 = vmatmul.mubr.f32.gmra.mxu0 %v1427
    %v1495 = vpop.f32.mrf.mxu0
    %v1496 = vadd.f32 0.0, %v1495
    %v1497 = vpop.f32.mrf.mxu0
    %1498 = vdwg.mxu0
    %v1500 = vrot.slane %v1496, 7
    %v1502 = vadd.f32 %v402, %v1500
    %v1503 = vtanh.pop %v1502
    %v1504 = vxor.u32 %v1502, 2147483648
    %v1505 = vmul.f32 %v1504, 1.442695
    %v1506 = vpow.pop %v1505
    %v1507 = vadd.f32 %v1506, 1.0
    %v1508 = vrcp.pop %v1507
    %v1509 = vmul.f32 1.0, %v1508
    %v1510 = vsel %vm415, %v1503, %v1509
    %v1512 = vrot.slane %v1415, 7
    %v1514 = vmul.f32 %v1510, %v1512
    %1516 = vrot.lane.b32.xlu0 %v1510, 64
    %v1517 = vpop.permute.xlu0 %1516
    %v1519 = vmul.f32 %v1510, %v1517
    %1521 = vrot.lane.b32.xlu0 %v1519, 32
    %v1522 = vpop.permute.xlu0 %1521
    %v1524 = vadd.f32 %v1514, %v1522
    %v1525 = vtanh.pop %v1524
    %1527 = vrot.lane.b32.xlu0 %v1525, 64
    %v1528 = vpop.permute.xlu0 %1527
    %v1530 = vmul.f32 %v1510, %v1528
    %1532 = vrot.lane.b32.xlu0 %v1530, 32
    %v1533 = vpop.permute.xlu0 %1532
    %1535 = vst.msk [vmem:[#allocation2 + $0x8] sm:$0x2] %vm633, %v1533
    %v1536 = vrot.slane %v1530, 1
    %1537 = vrot.lane.b32.xlu0 %v1536, 32
    %v1538 = vpop.permute.xlu0 %1537
    %v1539 = vsel %vm229, %v1538, 0
    %1541 = vmatprep.subr.mxu0 0.0
    %1542 = vmatpush1.msra.mxu0 0.0
    %1543 = vmatprep.subr.mxu0 0.0
    %1544 = vmatpush1.msra.mxu0 0.0
    %1545 = vmatprep.subr.mxu0 0.0
    %1546 = vmatpush1.msra.mxu0 0.0
    %1547 = vmatprep.subr.mxu0 0.0
    %1548 = vmatpush1.msra.mxu0 0.0
    %1549 = vmatprep.subr.mxu0 0.0
    %1550 = vmatpush1.msra.mxu0 0.0
    %1551 = vmatprep.subr.mxu0 0.0
    %1552 = vmatpush1.msra.mxu0 0.0
    %1553 = vmatprep.subr.mxu0 0.0
    %1554 = vmatpush1.msra.mxu0 0.0
    %1555 = vmatprep.subr.mxu0 0.0
    %1556 = vmatpush1.msra.mxu0 0.0
    %1557 = vmatprep.subr.mxu0 0.0
    %1558 = vmatpush1.msra.mxu0 0.0
    %1559 = vmatprep.subr.mxu0 0.0
    %1560 = vmatpush1.msra.mxu0 0.0
    %1561 = vmatprep.subr.mxu0 0.0
    %1562 = vmatpush1.msra.mxu0 0.0
    %1563 = vmatprep.subr.mxu0 0.0
    %1564 = vmatpush1.msra.mxu0 0.0
    %1565 = vmatprep.subr.mxu0 0.0
    %1566 = vmatpush1.msra.mxu0 %v408
    %1567 = vmatprep.subr.mxu0 0.0
    %1568 = vmatpush1.msra.mxu0 %v407
    %1569 = vmatprep.subr.mxu0 0.0
    %1570 = vmatpush1.msra.mxu0 %v406
    %1571 = vmatprep.subr.mxu0 0.0
    %1572 = vmatpush1.msra.mxu0 %v405
    %1573 = vmatprep.subr.mxu0 0.0
    %1574 = vmatpush2.msra.mxu0 0.0
    %1575 = vmatprep.subr.mxu0 0.0
    %1576 = vmatpush2.msra.mxu0 0.0
    %1577 = vmatprep.subr.mxu0 0.0
    %1578 = vmatpush2.msra.mxu0 0.0
    %1579 = vmatprep.subr.mxu0 0.0
    %1580 = vmatpush2.msra.mxu0 0.0
    %1581 = vmatprep.subr.mxu0 0.0
    %1582 = vmatpush2.msra.mxu0 0.0
    %1583 = vmatprep.subr.mxu0 0.0
    %1584 = vmatpush2.msra.mxu0 0.0
    %1585 = vmatprep.subr.mxu0 0.0
    %1586 = vmatpush2.msra.mxu0 0.0
    %1587 = vmatprep.subr.mxu0 0.0
    %1588 = vmatpush2.msra.mxu0 0.0
    %1589 = vmatprep.subr.mxu0 0.0
    %1590 = vmatpush2.msra.mxu0 0.0
    %1591 = vmatprep.subr.mxu0 0.0
    %1592 = vmatpush2.msra.mxu0 0.0
    %1593 = vmatprep.subr.mxu0 0.0
    %1594 = vmatpush2.msra.mxu0 0.0
    %1595 = vmatprep.subr.mxu0 0.0
    %1596 = vmatpush2.msra.mxu0 0.0
    %1597 = vmatprep.subr.mxu0 0.0
    %1598 = vmatpush2.msra.mxu0 0.0
    %1599 = vmatprep.subr.mxu0 0.0
    %1600 = vmatpush2.msra.mxu0 0.0
    %1601 = vmatprep.subr.mxu0 0.0
    %1602 = vmatpush2.msra.mxu0 0.0
    %1603 = vmatprep.subr.mxu0 0.0
    %1604 = vmatpush2.msra.mxu0 0.0
    %1605 = vmatprep.mubr.f32.mxu0 0.0
    %1606 = vmatmul.mubr.f32.gmra.mxu0 %v1539
    %v1607 = vpop.f32.mrf.mxu0
    %v1608 = vadd.f32 0.0, %v1607
    %v1609 = vpop.f32.mrf.mxu0
    %1610 = vdwg.mxu0
    %v1612 = vrot.slane %v1608, 6
    %v1614 = vadd.f32 %v402, %v1612
    %v1615 = vtanh.pop %v1614
    %v1616 = vxor.u32 %v1614, 2147483648
    %v1617 = vmul.f32 %v1616, 1.442695
    %v1618 = vpow.pop %v1617
    %v1619 = vadd.f32 %v1618, 1.0
    %v1620 = vrcp.pop %v1619
    %v1621 = vmul.f32 1.0, %v1620
    %v1622 = vsel %vm415, %v1615, %v1621
    %v1624 = vrot.slane %v1524, 7
    %v1626 = vmul.f32 %v1622, %v1624
    %1628 = vrot.lane.b32.xlu0 %v1622, 64
    %v1629 = vpop.permute.xlu0 %1628
    %v1631 = vmul.f32 %v1622, %v1629
    %1633 = vrot.lane.b32.xlu0 %v1631, 32
    %v1634 = vpop.permute.xlu0 %1633
    %v1636 = vadd.f32 %v1626, %v1634
    %v1637 = vtanh.pop %v1636
    %1639 = vrot.lane.b32.xlu0 %v1637, 64
    %v1640 = vpop.permute.xlu0 %1639
    %v1642 = vmul.f32 %v1622, %v1640
    %1644 = vrot.lane.b32.xlu0 %v1642, 32
    %v1645 = vpop.permute.xlu0 %1644
    %1647 = vst.msk [vmem:[#allocation2 + $0x8] sm:$0x4] %vm746, %v1645
    %v1648 = vrot.slane %v1642, 2
    %1649 = vrot.lane.b32.xlu0 %v1648, 32
    %v1650 = vpop.permute.xlu0 %1649
    %v1651 = vsel %vm229, %v1650, 0
    %1653 = vmatprep.subr.mxu0 0.0
    %1654 = vmatpush1.msra.mxu0 0.0
    %1655 = vmatprep.subr.mxu0 0.0
    %1656 = vmatpush1.msra.mxu0 0.0
    %1657 = vmatprep.subr.mxu0 0.0
    %1658 = vmatpush1.msra.mxu0 0.0
    %1659 = vmatprep.subr.mxu0 0.0
    %1660 = vmatpush1.msra.mxu0 0.0
    %1661 = vmatprep.subr.mxu0 0.0
    %1662 = vmatpush1.msra.mxu0 0.0
    %1663 = vmatprep.subr.mxu0 0.0
    %1664 = vmatpush1.msra.mxu0 0.0
    %1665 = vmatprep.subr.mxu0 0.0
    %1666 = vmatpush1.msra.mxu0 0.0
    %1667 = vmatprep.subr.mxu0 0.0
    %1668 = vmatpush1.msra.mxu0 0.0
    %1669 = vmatprep.subr.mxu0 0.0
    %1670 = vmatpush1.msra.mxu0 0.0
    %1671 = vmatprep.subr.mxu0 0.0
    %1672 = vmatpush1.msra.mxu0 0.0
    %1673 = vmatprep.subr.mxu0 0.0
    %1674 = vmatpush1.msra.mxu0 0.0
    %1675 = vmatprep.subr.mxu0 0.0
    %1676 = vmatpush1.msra.mxu0 0.0
    %1677 = vmatprep.subr.mxu0 0.0
    %1678 = vmatpush1.msra.mxu0 %v408
    %1679 = vmatprep.subr.mxu0 0.0
    %1680 = vmatpush1.msra.mxu0 %v407
    %1681 = vmatprep.subr.mxu0 0.0
    %1682 = vmatpush1.msra.mxu0 %v406
    %1683 = vmatprep.subr.mxu0 0.0
    %1684 = vmatpush1.msra.mxu0 %v405
    %1685 = vmatprep.subr.mxu0 0.0
    %1686 = vmatpush2.msra.mxu0 0.0
    %1687 = vmatprep.subr.mxu0 0.0
    %1688 = vmatpush2.msra.mxu0 0.0
    %1689 = vmatprep.subr.mxu0 0.0
    %1690 = vmatpush2.msra.mxu0 0.0
    %1691 = vmatprep.subr.mxu0 0.0
    %1692 = vmatpush2.msra.mxu0 0.0
    %1693 = vmatprep.subr.mxu0 0.0
    %1694 = vmatpush2.msra.mxu0 0.0
    %1695 = vmatprep.subr.mxu0 0.0
    %1696 = vmatpush2.msra.mxu0 0.0
    %1697 = vmatprep.subr.mxu0 0.0
    %1698 = vmatpush2.msra.mxu0 0.0
    %1699 = vmatprep.subr.mxu0 0.0
    %1700 = vmatpush2.msra.mxu0 0.0
    %1701 = vmatprep.subr.mxu0 0.0
    %1702 = vmatpush2.msra.mxu0 0.0
    %1703 = vmatprep.subr.mxu0 0.0
    %1704 = vmatpush2.msra.mxu0 0.0
    %1705 = vmatprep.subr.mxu0 0.0
    %1706 = vmatpush2.msra.mxu0 0.0
    %1707 = vmatprep.subr.mxu0 0.0
    %1708 = vmatpush2.msra.mxu0 0.0
    %1709 = vmatprep.subr.mxu0 0.0
    %1710 = vmatpush2.msra.mxu0 0.0
    %1711 = vmatprep.subr.mxu0 0.0
    %1712 = vmatpush2.msra.mxu0 0.0
    %1713 = vmatprep.subr.mxu0 0.0
    %1714 = vmatpush2.msra.mxu0 0.0
    %1715 = vmatprep.subr.mxu0 0.0
    %1716 = vmatpush2.msra.mxu0 0.0
    %1717 = vmatprep.mubr.f32.mxu0 0.0
    %1718 = vmatmul.mubr.f32.gmra.mxu0 %v1651
    %v1719 = vpop.f32.mrf.mxu0
    %v1720 = vadd.f32 0.0, %v1719
    %v1721 = vpop.f32.mrf.mxu0
    %1722 = vdwg.mxu0
    %v1724 = vrot.slane %v1720, 5
    %v1726 = vadd.f32 %v402, %v1724
    %v1727 = vtanh.pop %v1726
    %v1728 = vxor.u32 %v1726, 2147483648
    %v1729 = vmul.f32 %v1728, 1.442695
    %v1730 = vpow.pop %v1729
    %v1731 = vadd.f32 %v1730, 1.0
    %v1732 = vrcp.pop %v1731
    %v1733 = vmul.f32 1.0, %v1732
    %v1734 = vsel %vm415, %v1727, %v1733
    %v1736 = vrot.slane %v1636, 7
    %v1738 = vmul.f32 %v1734, %v1736
    %1740 = vrot.lane.b32.xlu0 %v1734, 64
    %v1741 = vpop.permute.xlu0 %1740
    %v1743 = vmul.f32 %v1734, %v1741
    %1745 = vrot.lane.b32.xlu0 %v1743, 32
    %v1746 = vpop.permute.xlu0 %1745
    %v1748 = vadd.f32 %v1738, %v1746
    %v1749 = vtanh.pop %v1748
    %1751 = vrot.lane.b32.xlu0 %v1749, 64
    %v1752 = vpop.permute.xlu0 %1751
    %v1754 = vmul.f32 %v1734, %v1752
    %1756 = vrot.lane.b32.xlu0 %v1754, 32
    %v1757 = vpop.permute.xlu0 %1756
    %1759 = vst.msk [vmem:[#allocation2 + $0x8] sm:$0x8] %vm859, %v1757
    %v1760 = vrot.slane %v1754, 3
    %1761 = vrot.lane.b32.xlu0 %v1760, 32
    %v1762 = vpop.permute.xlu0 %1761
    %v1763 = vsel %vm229, %v1762, 0
    %1765 = vmatprep.subr.mxu0 0.0
    %1766 = vmatpush1.msra.mxu0 0.0
    %1767 = vmatprep.subr.mxu0 0.0
    %1768 = vmatpush1.msra.mxu0 0.0
    %1769 = vmatprep.subr.mxu0 0.0
    %1770 = vmatpush1.msra.mxu0 0.0
    %1771 = vmatprep.subr.mxu0 0.0
    %1772 = vmatpush1.msra.mxu0 0.0
    %1773 = vmatprep.subr.mxu0 0.0
    %1774 = vmatpush1.msra.mxu0 0.0
    %1775 = vmatprep.subr.mxu0 0.0
    %1776 = vmatpush1.msra.mxu0 0.0
    %1777 = vmatprep.subr.mxu0 0.0
    %1778 = vmatpush1.msra.mxu0 0.0
    %1779 = vmatprep.subr.mxu0 0.0
    %1780 = vmatpush1.msra.mxu0 0.0
    %1781 = vmatprep.subr.mxu0 0.0
    %1782 = vmatpush1.msra.mxu0 0.0
    %1783 = vmatprep.subr.mxu0 0.0
    %1784 = vmatpush1.msra.mxu0 0.0
    %1785 = vmatprep.subr.mxu0 0.0
    %1786 = vmatpush1.msra.mxu0 0.0
    %1787 = vmatprep.subr.mxu0 0.0
    %1788 = vmatpush1.msra.mxu0 0.0
    %1789 = vmatprep.subr.mxu0 0.0
    %1790 = vmatpush1.msra.mxu0 %v408
    %1791 = vmatprep.subr.mxu0 0.0
    %1792 = vmatpush1.msra.mxu0 %v407
    %1793 = vmatprep.subr.mxu0 0.0
    %1794 = vmatpush1.msra.mxu0 %v406
    %1795 = vmatprep.subr.mxu0 0.0
    %1796 = vmatpush1.msra.mxu0 %v405
    %1797 = vmatprep.subr.mxu0 0.0
    %1798 = vmatpush2.msra.mxu0 0.0
    %1799 = vmatprep.subr.mxu0 0.0
    %1800 = vmatpush2.msra.mxu0 0.0
    %1801 = vmatprep.subr.mxu0 0.0
    %1802 = vmatpush2.msra.mxu0 0.0
    %1803 = vmatprep.subr.mxu0 0.0
    %1804 = vmatpush2.msra.mxu0 0.0
    %1805 = vmatprep.subr.mxu0 0.0
    %1806 = vmatpush2.msra.mxu0 0.0
    %1807 = vmatprep.subr.mxu0 0.0
    %1808 = vmatpush2.msra.mxu0 0.0
    %1809 = vmatprep.subr.mxu0 0.0
    %1810 = vmatpush2.msra.mxu0 0.0
    %1811 = vmatprep.subr.mxu0 0.0
    %1812 = vmatpush2.msra.mxu0 0.0
    %1813 = vmatprep.subr.mxu0 0.0
    %1814 = vmatpush2.msra.mxu0 0.0
    %1815 = vmatprep.subr.mxu0 0.0
    %1816 = vmatpush2.msra.mxu0 0.0
    %1817 = vmatprep.subr.mxu0 0.0
    %1818 = vmatpush2.msra.mxu0 0.0
    %1819 = vmatprep.subr.mxu0 0.0
    %1820 = vmatpush2.msra.mxu0 0.0
    %1821 = vmatprep.subr.mxu0 0.0
    %1822 = vmatpush2.msra.mxu0 0.0
    %1823 = vmatprep.subr.mxu0 0.0
    %1824 = vmatpush2.msra.mxu0 0.0
    %1825 = vmatprep.subr.mxu0 0.0
    %1826 = vmatpush2.msra.mxu0 0.0
    %1827 = vmatprep.subr.mxu0 0.0
    %1828 = vmatpush2.msra.mxu0 0.0
    %1829 = vmatprep.mubr.f32.mxu0 0.0
    %1830 = vmatmul.mubr.f32.gmra.mxu0 %v1763
    %v1831 = vpop.f32.mrf.mxu0
    %v1832 = vadd.f32 0.0, %v1831
    %v1833 = vpop.f32.mrf.mxu0
    %1834 = vdwg.mxu0
    %v1836 = vrot.slane %v1832, 4
    %v1838 = vadd.f32 %v402, %v1836
    %v1839 = vtanh.pop %v1838
    %v1840 = vxor.u32 %v1838, 2147483648
    %v1841 = vmul.f32 %v1840, 1.442695
    %v1842 = vpow.pop %v1841
    %v1843 = vadd.f32 %v1842, 1.0
    %v1844 = vrcp.pop %v1843
    %v1845 = vmul.f32 1.0, %v1844
    %v1846 = vsel %vm415, %v1839, %v1845
    %v1848 = vrot.slane %v1748, 7
    %v1850 = vmul.f32 %v1846, %v1848
    %1852 = vrot.lane.b32.xlu0 %v1846, 64
    %v1853 = vpop.permute.xlu0 %1852
    %v1855 = vmul.f32 %v1846, %v1853
    %1857 = vrot.lane.b32.xlu0 %v1855, 32
    %v1858 = vpop.permute.xlu0 %1857
    %v1860 = vadd.f32 %v1850, %v1858
    %v1861 = vtanh.pop %v1860
    %1863 = vrot.lane.b32.xlu0 %v1861, 64
    %v1864 = vpop.permute.xlu0 %1863
    %v1866 = vmul.f32 %v1846, %v1864
    %1868 = vrot.lane.b32.xlu0 %v1866, 32
    %v1869 = vpop.permute.xlu0 %1868
    %1871 = vst.msk [vmem:[#allocation2 + $0x8] sm:$0x10] %vm972, %v1869
    %v1872 = vrot.slane %v1866, 4
    %1873 = vrot.lane.b32.xlu0 %v1872, 32
    %v1874 = vpop.permute.xlu0 %1873
    %v1875 = vsel %vm229, %v1874, 0
    %1877 = vmatprep.subr.mxu0 0.0
    %1878 = vmatpush1.msra.mxu0 0.0
    %1879 = vmatprep.subr.mxu0 0.0
    %1880 = vmatpush1.msra.mxu0 0.0
    %1881 = vmatprep.subr.mxu0 0.0
    %1882 = vmatpush1.msra.mxu0 0.0
    %1883 = vmatprep.subr.mxu0 0.0
    %1884 = vmatpush1.msra.mxu0 0.0
    %1885 = vmatprep.subr.mxu0 0.0
    %1886 = vmatpush1.msra.mxu0 0.0
    %1887 = vmatprep.subr.mxu0 0.0
    %1888 = vmatpush1.msra.mxu0 0.0
    %1889 = vmatprep.subr.mxu0 0.0
    %1890 = vmatpush1.msra.mxu0 0.0
    %1891 = vmatprep.subr.mxu0 0.0
    %1892 = vmatpush1.msra.mxu0 0.0
    %1893 = vmatprep.subr.mxu0 0.0
    %1894 = vmatpush1.msra.mxu0 0.0
    %1895 = vmatprep.subr.mxu0 0.0
    %1896 = vmatpush1.msra.mxu0 0.0
    %1897 = vmatprep.subr.mxu0 0.0
    %1898 = vmatpush1.msra.mxu0 0.0
    %1899 = vmatprep.subr.mxu0 0.0
    %1900 = vmatpush1.msra.mxu0 0.0
    %1901 = vmatprep.subr.mxu0 0.0
    %1902 = vmatpush1.msra.mxu0 %v408
    %1903 = vmatprep.subr.mxu0 0.0
    %1904 = vmatpush1.msra.mxu0 %v407
    %1905 = vmatprep.subr.mxu0 0.0
    %1906 = vmatpush1.msra.mxu0 %v406
    %1907 = vmatprep.subr.mxu0 0.0
    %1908 = vmatpush1.msra.mxu0 %v405
    %1909 = vmatprep.subr.mxu0 0.0
    %1910 = vmatpush2.msra.mxu0 0.0
    %1911 = vmatprep.subr.mxu0 0.0
    %1912 = vmatpush2.msra.mxu0 0.0
    %1913 = vmatprep.subr.mxu0 0.0
    %1914 = vmatpush2.msra.mxu0 0.0
    %1915 = vmatprep.subr.mxu0 0.0
    %1916 = vmatpush2.msra.mxu0 0.0
    %1917 = vmatprep.subr.mxu0 0.0
    %1918 = vmatpush2.msra.mxu0 0.0
    %1919 = vmatprep.subr.mxu0 0.0
    %1920 = vmatpush2.msra.mxu0 0.0
    %1921 = vmatprep.subr.mxu0 0.0
    %1922 = vmatpush2.msra.mxu0 0.0
    %1923 = vmatprep.subr.mxu0 0.0
    %1924 = vmatpush2.msra.mxu0 0.0
    %1925 = vmatprep.subr.mxu0 0.0
    %1926 = vmatpush2.msra.mxu0 0.0
    %1927 = vmatprep.subr.mxu0 0.0
    %1928 = vmatpush2.msra.mxu0 0.0
    %1929 = vmatprep.subr.mxu0 0.0
    %1930 = vmatpush2.msra.mxu0 0.0
    %1931 = vmatprep.subr.mxu0 0.0
    %1932 = vmatpush2.msra.mxu0 0.0
    %1933 = vmatprep.subr.mxu0 0.0
    %1934 = vmatpush2.msra.mxu0 0.0
    %1935 = vmatprep.subr.mxu0 0.0
    %1936 = vmatpush2.msra.mxu0 0.0
    %1937 = vmatprep.subr.mxu0 0.0
    %1938 = vmatpush2.msra.mxu0 0.0
    %1939 = vmatprep.subr.mxu0 0.0
    %1940 = vmatpush2.msra.mxu0 0.0
    %1941 = vmatprep.mubr.f32.mxu0 0.0
    %1942 = vmatmul.mubr.f32.gmra.mxu0 %v1875
    %v1943 = vpop.f32.mrf.mxu0
    %v1944 = vadd.f32 0.0, %v1943
    %v1945 = vpop.f32.mrf.mxu0
    %1946 = vdwg.mxu0
    %v1948 = vrot.slane %v1944, 3
    %v1950 = vadd.f32 %v402, %v1948
    %v1951 = vtanh.pop %v1950
    %v1952 = vxor.u32 %v1950, 2147483648
    %v1953 = vmul.f32 %v1952, 1.442695
    %v1954 = vpow.pop %v1953
    %v1955 = vadd.f32 %v1954, 1.0
    %v1956 = vrcp.pop %v1955
    %v1957 = vmul.f32 1.0, %v1956
    %v1958 = vsel %vm415, %v1951, %v1957
    %v1960 = vrot.slane %v1860, 7
    %v1962 = vmul.f32 %v1958, %v1960
    %1964 = vrot.lane.b32.xlu0 %v1958, 64
    %v1965 = vpop.permute.xlu0 %1964
    %v1967 = vmul.f32 %v1958, %v1965
    %1969 = vrot.lane.b32.xlu0 %v1967, 32
    %v1970 = vpop.permute.xlu0 %1969
    %v1972 = vadd.f32 %v1962, %v1970
    %v1973 = vtanh.pop %v1972
    %1975 = vrot.lane.b32.xlu0 %v1973, 64
    %v1976 = vpop.permute.xlu0 %1975
    %v1978 = vmul.f32 %v1958, %v1976
    %1980 = vrot.lane.b32.xlu0 %v1978, 32
    %v1981 = vpop.permute.xlu0 %1980
    %1983 = vst.msk [vmem:[#allocation2 + $0x8] sm:$0x20] %vm1085, %v1981
    %v1984 = vrot.slane %v1978, 5
    %1985 = vrot.lane.b32.xlu0 %v1984, 32
    %v1986 = vpop.permute.xlu0 %1985
    %v1987 = vsel %vm229, %v1986, 0
    %1989 = vmatprep.subr.mxu0 0.0
    %1990 = vmatpush1.msra.mxu0 0.0
    %1991 = vmatprep.subr.mxu0 0.0
    %1992 = vmatpush1.msra.mxu0 0.0
    %1993 = vmatprep.subr.mxu0 0.0
    %1994 = vmatpush1.msra.mxu0 0.0
    %1995 = vmatprep.subr.mxu0 0.0
    %1996 = vmatpush1.msra.mxu0 0.0
    %1997 = vmatprep.subr.mxu0 0.0
    %1998 = vmatpush1.msra.mxu0 0.0
    %1999 = vmatprep.subr.mxu0 0.0
    %2000 = vmatpush1.msra.mxu0 0.0
    %2001 = vmatprep.subr.mxu0 0.0
    %2002 = vmatpush1.msra.mxu0 0.0
    %2003 = vmatprep.subr.mxu0 0.0
    %2004 = vmatpush1.msra.mxu0 0.0
    %2005 = vmatprep.subr.mxu0 0.0
    %2006 = vmatpush1.msra.mxu0 0.0
    %2007 = vmatprep.subr.mxu0 0.0
    %2008 = vmatpush1.msra.mxu0 0.0
    %2009 = vmatprep.subr.mxu0 0.0
    %2010 = vmatpush1.msra.mxu0 0.0
    %2011 = vmatprep.subr.mxu0 0.0
    %2012 = vmatpush1.msra.mxu0 0.0
    %2013 = vmatprep.subr.mxu0 0.0
    %2014 = vmatpush1.msra.mxu0 %v408
    %2015 = vmatprep.subr.mxu0 0.0
    %2016 = vmatpush1.msra.mxu0 %v407
    %2017 = vmatprep.subr.mxu0 0.0
    %2018 = vmatpush1.msra.mxu0 %v406
    %2019 = vmatprep.subr.mxu0 0.0
    %2020 = vmatpush1.msra.mxu0 %v405
    %2021 = vmatprep.subr.mxu0 0.0
    %2022 = vmatpush2.msra.mxu0 0.0
    %2023 = vmatprep.subr.mxu0 0.0
    %2024 = vmatpush2.msra.mxu0 0.0
    %2025 = vmatprep.subr.mxu0 0.0
    %2026 = vmatpush2.msra.mxu0 0.0
    %2027 = vmatprep.subr.mxu0 0.0
    %2028 = vmatpush2.msra.mxu0 0.0
    %2029 = vmatprep.subr.mxu0 0.0
    %2030 = vmatpush2.msra.mxu0 0.0
    %2031 = vmatprep.subr.mxu0 0.0
    %2032 = vmatpush2.msra.mxu0 0.0
    %2033 = vmatprep.subr.mxu0 0.0
    %2034 = vmatpush2.msra.mxu0 0.0
    %2035 = vmatprep.subr.mxu0 0.0
    %2036 = vmatpush2.msra.mxu0 0.0
    %2037 = vmatprep.subr.mxu0 0.0
    %2038 = vmatpush2.msra.mxu0 0.0
    %2039 = vmatprep.subr.mxu0 0.0
    %2040 = vmatpush2.msra.mxu0 0.0
    %2041 = vmatprep.subr.mxu0 0.0
    %2042 = vmatpush2.msra.mxu0 0.0
    %2043 = vmatprep.subr.mxu0 0.0
    %2044 = vmatpush2.msra.mxu0 0.0
    %2045 = vmatprep.subr.mxu0 0.0
    %2046 = vmatpush2.msra.mxu0 0.0
    %2047 = vmatprep.subr.mxu0 0.0
    %2048 = vmatpush2.msra.mxu0 0.0
    %2049 = vmatprep.subr.mxu0 0.0
    %2050 = vmatpush2.msra.mxu0 0.0
    %2051 = vmatprep.subr.mxu0 0.0
    %2052 = vmatpush2.msra.mxu0 0.0
    %2053 = vmatprep.mubr.f32.mxu0 0.0
    %2054 = vmatmul.mubr.f32.gmra.mxu0 %v1987
    %v2055 = vpop.f32.mrf.mxu0
    %v2056 = vadd.f32 0.0, %v2055
    %v2057 = vpop.f32.mrf.mxu0
    %2058 = vdwg.mxu0
    %v2060 = vrot.slane %v2056, 2
    %v2062 = vadd.f32 %v402, %v2060
    %v2063 = vtanh.pop %v2062
    %v2064 = vxor.u32 %v2062, 2147483648
    %v2065 = vmul.f32 %v2064, 1.442695
    %v2066 = vpow.pop %v2065
    %v2067 = vadd.f32 %v2066, 1.0
    %v2068 = vrcp.pop %v2067
    %v2069 = vmul.f32 1.0, %v2068
    %v2070 = vsel %vm415, %v2063, %v2069
    %v2072 = vrot.slane %v1972, 7
    %v2074 = vmul.f32 %v2070, %v2072
    %2076 = vrot.lane.b32.xlu0 %v2070, 64
    %v2077 = vpop.permute.xlu0 %2076
    %v2079 = vmul.f32 %v2070, %v2077
    %2081 = vrot.lane.b32.xlu0 %v2079, 32
    %v2082 = vpop.permute.xlu0 %2081
    %v2084 = vadd.f32 %v2074, %v2082
    %v2085 = vtanh.pop %v2084
    %2087 = vrot.lane.b32.xlu0 %v2085, 64
    %v2088 = vpop.permute.xlu0 %2087
    %v2090 = vmul.f32 %v2070, %v2088
    %2092 = vrot.lane.b32.xlu0 %v2090, 32
    %v2093 = vpop.permute.xlu0 %2092
    %2095 = vst.msk [vmem:[#allocation2 + $0x8] sm:$0x40] %vm1198, %v2093
    %v2096 = vrot.slane %v2090, 6
    %2097 = vrot.lane.b32.xlu0 %v2096, 32
    %v2098 = vpop.permute.xlu0 %2097
    %v2099 = vsel %vm229, %v2098, 0
    %2101 = vmatprep.subr.mxu0 0.0
    %2102 = vmatpush1.msra.mxu0 0.0
    %2103 = vmatprep.subr.mxu0 0.0
    %2104 = vmatpush1.msra.mxu0 0.0
    %2105 = vmatprep.subr.mxu0 0.0
    %2106 = vmatpush1.msra.mxu0 0.0
    %2107 = vmatprep.subr.mxu0 0.0
    %2108 = vmatpush1.msra.mxu0 0.0
    %2109 = vmatprep.subr.mxu0 0.0
    %2110 = vmatpush1.msra.mxu0 0.0
    %2111 = vmatprep.subr.mxu0 0.0
    %2112 = vmatpush1.msra.mxu0 0.0
    %2113 = vmatprep.subr.mxu0 0.0
    %2114 = vmatpush1.msra.mxu0 0.0
    %2115 = vmatprep.subr.mxu0 0.0
    %2116 = vmatpush1.msra.mxu0 0.0
    %2117 = vmatprep.subr.mxu0 0.0
    %2118 = vmatpush1.msra.mxu0 0.0
    %2119 = vmatprep.subr.mxu0 0.0
    %2120 = vmatpush1.msra.mxu0 0.0
    %2121 = vmatprep.subr.mxu0 0.0
    %2122 = vmatpush1.msra.mxu0 0.0
    %2123 = vmatprep.subr.mxu0 0.0
    %2124 = vmatpush1.msra.mxu0 0.0
    %2125 = vmatprep.subr.mxu0 0.0
    %2126 = vmatpush1.msra.mxu0 %v408
    %2127 = vmatprep.subr.mxu0 0.0
    %2128 = vmatpush1.msra.mxu0 %v407
    %2129 = vmatprep.subr.mxu0 0.0
    %2130 = vmatpush1.msra.mxu0 %v406
    %2131 = vmatprep.subr.mxu0 0.0
    %2132 = vmatpush1.msra.mxu0 %v405
    %2133 = vmatprep.subr.mxu0 0.0
    %2134 = vmatpush2.msra.mxu0 0.0
    %2135 = vmatprep.subr.mxu0 0.0
    %2136 = vmatpush2.msra.mxu0 0.0
    %2137 = vmatprep.subr.mxu0 0.0
    %2138 = vmatpush2.msra.mxu0 0.0
    %2139 = vmatprep.subr.mxu0 0.0
    %2140 = vmatpush2.msra.mxu0 0.0
    %2141 = vmatprep.subr.mxu0 0.0
    %2142 = vmatpush2.msra.mxu0 0.0
    %2143 = vmatprep.subr.mxu0 0.0
    %2144 = vmatpush2.msra.mxu0 0.0
    %2145 = vmatprep.subr.mxu0 0.0
    %2146 = vmatpush2.msra.mxu0 0.0
    %2147 = vmatprep.subr.mxu0 0.0
    %2148 = vmatpush2.msra.mxu0 0.0
    %2149 = vmatprep.subr.mxu0 0.0
    %2150 = vmatpush2.msra.mxu0 0.0
    %2151 = vmatprep.subr.mxu0 0.0
    %2152 = vmatpush2.msra.mxu0 0.0
    %2153 = vmatprep.subr.mxu0 0.0
    %2154 = vmatpush2.msra.mxu0 0.0
    %2155 = vmatprep.subr.mxu0 0.0
    %2156 = vmatpush2.msra.mxu0 0.0
    %2157 = vmatprep.subr.mxu0 0.0
    %2158 = vmatpush2.msra.mxu0 0.0
    %2159 = vmatprep.subr.mxu0 0.0
    %2160 = vmatpush2.msra.mxu0 0.0
    %2161 = vmatprep.subr.mxu0 0.0
    %2162 = vmatpush2.msra.mxu0 0.0
    %2163 = vmatprep.subr.mxu0 0.0
    %2164 = vmatpush2.msra.mxu0 0.0
    %2165 = vmatprep.mubr.f32.mxu0 0.0
    %2166 = vmatmul.mubr.f32.gmra.mxu0 %v2099
    %v2167 = vpop.f32.mrf.mxu0
    %v2168 = vadd.f32 0.0, %v2167
    %v2169 = vpop.f32.mrf.mxu0
    %2170 = vdwg.mxu0
    %v2172 = vrot.slane %v2168, 1
    %v2174 = vadd.f32 %v402, %v2172
    %v2175 = vtanh.pop %v2174
    %v2176 = vxor.u32 %v2174, 2147483648
    %v2177 = vmul.f32 %v2176, 1.442695
    %v2178 = vpow.pop %v2177
    %v2179 = vadd.f32 %v2178, 1.0
    %v2180 = vrcp.pop %v2179
    %v2181 = vmul.f32 1.0, %v2180
    %v2182 = vsel %vm415, %v2175, %v2181
    %v2184 = vrot.slane %v2084, 7
    %v2186 = vmul.f32 %v2182, %v2184
    %2188 = vrot.lane.b32.xlu0 %v2182, 64
    %v2189 = vpop.permute.xlu0 %2188
    %v2191 = vmul.f32 %v2182, %v2189
    %2193 = vrot.lane.b32.xlu0 %v2191, 32
    %v2194 = vpop.permute.xlu0 %2193
    %v2196 = vadd.f32 %v2186, %v2194
    %v2197 = vtanh.pop %v2196
    %2199 = vrot.lane.b32.xlu0 %v2197, 64
    %v2200 = vpop.permute.xlu0 %2199
    %v2202 = vmul.f32 %v2182, %v2200
    %2204 = vrot.lane.b32.xlu0 %v2202, 32
    %v2205 = vpop.permute.xlu0 %2204
    %2207 = vst.msk [vmem:[#allocation2 + $0x8] sm:$0x80] %vm1311, %v2205
    %2208 = vst.msk [vmem:[#allocation14 - $0x6] sm:$0x80] %vm1311, %v2205
    %2210 = vrot.lane.b32.xlu0 %v2196, 96
    %v2211 = vpop.permute.xlu0 %2210
    %2213 = vst.msk [vmem:[#allocation15 - $0x6] sm:$0x80] %vm1311, %v2211
    %v2214 = vld [vmem:[#allocation2] sm:$0xff]
    %v2215 = vld [vmem:[#allocation2 + $0x8] sm:$0xff]
    %v2216 = vtanh.pop %v2214
    %v2217 = vtanh.pop %v2215
    %v2218 = vld [vmem:[%s9] sm:$0xff]
    %v2219 = vld [vmem:[%s9 + $0x8] sm:$0xff]
    %v2220 = vld [vmem:[%s9 + $0x10] sm:$0xff]
    %v2221 = vld [vmem:[%s9 + $0x18] sm:$0xff]
    %v2222 = vld [vmem:[#allocation12] sm:$0x1]
    %v2224 = vlaneseq
    %v2225 = vshrl.u32 %v2224, 7
    %v2226 = vsub.s32 0, %v2225
    %v2227 = vrot.slane %v2222, %v2226
    %v2230 = vsel %vm229, %v2216, 0
    %v2233 = vsel %vm229, %v2217, 0
    %2235 = vmatprep.subr.mxu0 0.0
    %2236 = vmatpush1.msra.mxu0 0.0
    %2237 = vmatprep.subr.mxu0 0.0
    %2238 = vmatpush1.msra.mxu0 0.0
    %2239 = vmatprep.subr.mxu0 0.0
    %2240 = vmatpush1.msra.mxu0 0.0
    %2241 = vmatprep.subr.mxu0 0.0
    %2242 = vmatpush1.msra.mxu0 0.0
    %2243 = vmatprep.subr.mxu0 0.0
    %2244 = vmatpush1.msra.mxu0 0.0
    %2245 = vmatprep.subr.mxu0 0.0
    %2246 = vmatpush1.msra.mxu0 0.0
    %2247 = vmatprep.subr.mxu0 0.0
    %2248 = vmatpush1.msra.mxu0 0.0
    %2249 = vmatprep.subr.mxu0 0.0
    %2250 = vmatpush1.msra.mxu0 0.0
    %2251 = vmatprep.subr.mxu0 0.0
    %2252 = vmatpush1.msra.mxu0 0.0
    %2253 = vmatprep.subr.mxu0 0.0
    %2254 = vmatpush1.msra.mxu0 0.0
    %2255 = vmatprep.subr.mxu0 0.0
    %2256 = vmatpush1.msra.mxu0 0.0
    %2257 = vmatprep.subr.mxu0 0.0
    %2258 = vmatpush1.msra.mxu0 0.0
    %2259 = vmatprep.subr.mxu0 0.0
    %2260 = vmatpush1.msra.mxu0 %v2221
    %2261 = vmatprep.subr.mxu0 0.0
    %2262 = vmatpush1.msra.mxu0 %v2220
    %2263 = vmatprep.subr.mxu0 0.0
    %2264 = vmatpush1.msra.mxu0 %v2219
    %2265 = vmatprep.subr.mxu0 0.0
    %2266 = vmatpush1.msra.mxu0 %v2218
    %2267 = vmatprep.subr.mxu0 0.0
    %2268 = vmatpush2.msra.mxu0 0.0
    %2269 = vmatprep.subr.mxu0 0.0
    %2270 = vmatpush2.msra.mxu0 0.0
    %2271 = vmatprep.subr.mxu0 0.0
    %2272 = vmatpush2.msra.mxu0 0.0
    %2273 = vmatprep.subr.mxu0 0.0
    %2274 = vmatpush2.msra.mxu0 0.0
    %2275 = vmatprep.subr.mxu0 0.0
    %2276 = vmatpush2.msra.mxu0 0.0
    %2277 = vmatprep.subr.mxu0 0.0
    %2278 = vmatpush2.msra.mxu0 0.0
    %2279 = vmatprep.subr.mxu0 0.0
    %2280 = vmatpush2.msra.mxu0 0.0
    %2281 = vmatprep.subr.mxu0 0.0
    %2282 = vmatpush2.msra.mxu0 0.0
    %2283 = vmatprep.subr.mxu0 0.0
    %2284 = vmatpush2.msra.mxu0 0.0
    %2285 = vmatprep.subr.mxu0 0.0
    %2286 = vmatpush2.msra.mxu0 0.0
    %2287 = vmatprep.subr.mxu0 0.0
    %2288 = vmatpush2.msra.mxu0 0.0
    %2289 = vmatprep.subr.mxu0 0.0
    %2290 = vmatpush2.msra.mxu0 0.0
    %2291 = vmatprep.subr.mxu0 0.0
    %2292 = vmatpush2.msra.mxu0 0.0
    %2293 = vmatprep.subr.mxu0 0.0
    %2294 = vmatpush2.msra.mxu0 0.0
    %2295 = vmatprep.subr.mxu0 0.0
    %2296 = vmatpush2.msra.mxu0 0.0
    %2297 = vmatprep.subr.mxu0 0.0
    %2298 = vmatpush2.msra.mxu0 0.0
    %2299 = vmatprep.mubr.f32.mxu0 0.0
    %2300 = vmatmul.mubr.f32.gmra.mxu0 %v2230
    %v2301 = vpop.f32.mrf.mxu0
    %v2302 = vadd.f32 %v2227, %v2301
    %v2303 = vpop.f32.mrf.mxu0
    %2304 = vmatprep.mubr.f32.mxu0 0.0
    %2305 = vmatmul.mubr.f32.gmra.mxu0 %v2233
    %v2306 = vpop.f32.mrf.mxu0
    %v2307 = vadd.f32 %v2227, %v2306
    %v2308 = vpop.f32.mrf.mxu0
    %2309 = vdwg.mxu0
    %v2310 = vld [vmem:[%s1] sm:$0xff]
    %v2311 = vld [vmem:[%s1 + $0x8] sm:$0xff]
    %v2312 = vlog2.pop %v2310
    %v2313 = vmul.f32 %v2312, 0.6931472
    %v2314 = vlog2.pop %v2311
    %v2315 = vmul.f32 %v2314, 0.6931472
    %v2316 = vmax.f32 %v2313, -3.4028235e+38
    %v2317 = vmax.f32 %v2315, -3.4028235e+38
    %v2318 = vadd.f32 %v2302, %v2316
    %v2319 = vadd.f32 %v2307, %v2317
    %vm2320 = vcmask 64512
    %2321 = vst.msk [vmem:[%s13] sm:$0xff] %vm2320, %v2318
    %2322 = vst.msk [vmem:[%s13 + $0x8] sm:$0xff] %vm2320, %v2319
    // Predicated region
    $region78: #{rlib_lstm_forward.1} parent=1 // pred_check
      _
    $region79: #{rlib_lstm_forward.1} parent=1 // pred_check_branch
      %2324 = sbr.rel (0) target = $region81
    $region80: #{rlib_lstm_forward.1} parent=1 // pred_region
      _
    $region81: #{rlib_lstm_forward.1} parent=1 // pred_fallthru
      _
    // Predicated region
    $region82: #{rlib_lstm_forward.1} parent=1 // pred_check
      _
    $region83: #{rlib_lstm_forward.1} parent=1 // pred_check_branch
      %2326 = sbr.rel (0) target = $region85
    $region84: #{rlib_lstm_forward.1} parent=1 // pred_region
      %s2328 = ssub.s32 32, 32
      %2329 = vsyncadd [#allocation5], %s2328
      %s2331 = sshll.u32 [#allocation14], 4
      %s2332 = int_to_ptr.vmem [resolvable:$true] %s2331
      %2334 = dma.vmem_to_hbm [thread:$0]  %s2332, 32, %s14, [#allocation5]
    $region85: #{rlib_lstm_forward.1} parent=1 // pred_fallthru
      _
    // Predicated region
    $region86: #{rlib_lstm_forward.1} parent=1 // pred_check
      _
    $region87: #{rlib_lstm_forward.1} parent=1 // pred_check_branch
      %2336 = sbr.rel (0) target = $region89
    $region88: #{rlib_lstm_forward.1} parent=1 // pred_region
      %s2338 = ssub.s32 32, 32
      %2339 = vsyncadd [#allocation16], %s2338
      %s2341 = sshll.u32 [#allocation15], 4
      %s2342 = int_to_ptr.vmem [resolvable:$true] %s2341
      %2344 = dma.vmem_to_hbm [thread:$0]  %s2342, 32, %s15, [#allocation16]
    $region89: #{rlib_lstm_forward.1} parent=1 // pred_fallthru
      _
    // Predicated region
    $region90: #{rlib_lstm_forward.1} parent=1 // pred_check
      _
    $region91: #{rlib_lstm_forward.1} parent=1 // pred_check_branch
      %2346 = sbr.rel (0) target = $region93
    $region92: #{rlib_lstm_forward.1} parent=1 // pred_region
      _
    $region93: #{rlib_lstm_forward.1} parent=1 // pred_fallthru
      _
    // Predicated region
    $region94: #{rlib_lstm_forward.1} parent=1 // pred_check
      _
    $region95: #{rlib_lstm_forward.1} parent=1 // pred_check_branch
      %2348 = sbr.rel (0) target = $region97
    $region96: #{rlib_lstm_forward.1} parent=1 // pred_region
      %2349 = dma.done [#allocation5], 32
    $region97: #{rlib_lstm_forward.1} parent=1 // pred_fallthru
      _
    // Predicated region
    $region98: #{rlib_lstm_forward.1} parent=1 // pred_check
      _
    $region99: #{rlib_lstm_forward.1} parent=1 // pred_check_branch
      %2351 = sbr.rel (0) target = $region101
    $region100: #{rlib_lstm_forward.1} parent=1 // pred_region
      %2352 = dma.done [#allocation16], 32
    $region101: #{rlib_lstm_forward.1} parent=1 // pred_fallthru
      _
    %2353 = vsyncpa [#allocation4], 1
    %2354 = vsyncpa [#allocation7], 1
    %2355 = vsyncpa [#allocation10], 1
    %2356 = vsyncpa [#allocation13], 1
    %2357 = vsyncpa [#allocation5], 1
    %2358 = vsyncpa [#allocation16], 1

</llo_original>
